<compile_context>
chip_gen: v7x
topology: tpu7x:2x2x1
jax: 0.10.0
libtpu: 0.0.40
codegen_flags: <defaults>
</compile_context>

<pallas_src>
import functools

import jax
import jax.numpy as jnp
from jax.experimental import pallas as pl
from jax.experimental.pallas import tpu as pltpu


def _tcsa_kernel(x_ref, ta_w1t_ref, ta_w2_ref, ca_w1_ref, ca_w2t_ref, wsa_ref,
                 o_ref, pad_ref, *, h, w):
    bb, T, C, HW = x_ref.shape
    assert HW == h * w
    f32 = jnp.float32

    x = x_ref[...]                                   # (bb, T, C, HW), input dtype
    xf = x.astype(f32)

    # ---- reduction statistics of x (everything else is derived from these) ----
    sum_ck = jnp.sum(xf, axis=3)                     # (bb, T, C)   sum over HW (lanes)
    max_ck = jnp.max(xf, axis=3)                     # (bb, T, C)
    sum_tk = jnp.sum(xf, axis=2)                     # (bb, T, HW)  sum over C (sublanes)
    max_tk = jnp.max(xf, axis=2)                     # (bb, T, HW)

    # ---- TimeAttention: per-t gate (VPU only, no MXU) ----
    w1t = ta_w1t_ref[...].astype(f32)                # (T, Tr)  == W1^T
    w2 = ta_w2_ref[...].astype(f32)                  # (T, Tr)  == W2

    def mlp_col(v):                                  # v: (bb, T, 1) -> (bb, T, 1)
        hid = jnp.maximum(jnp.sum(w1t[None] * v, axis=1, keepdims=True), 0.0)   # (bb,1,Tr)
        return jnp.sum(w2[None] * hid, axis=2, keepdims=True)                   # (bb,T,1)

    avg_t = jnp.sum(sum_ck, axis=2, keepdims=True) * (1.0 / (C * HW))           # (bb,T,1)
    max_t = jnp.max(max_ck, axis=2, keepdims=True)                              # (bb,T,1)
    ta = jax.nn.sigmoid(mlp_col(avg_t) + mlp_col(max_t))                        # (bb,T,1)

    # ---- ChannelAttention on out1 = ta * x (never materialized; ta > 0) ----
    c_w1 = ca_w1_ref[...].astype(f32)                # (Cr, C)  == Wc1
    c_w2t = ca_w2t_ref[...].astype(f32)              # (Cr, C)  == Wc2^T

    def mlp_row(p):                                  # p: (bb, 1, C) -> (bb, 1, C)
        hid = jnp.maximum(jnp.sum(c_w1[None] * p, axis=2, keepdims=True), 0.0)  # (bb,Cr,1)
        return jnp.sum(c_w2t[None] * hid, axis=1, keepdims=True)                # (bb,1,C)

    avg_c = jnp.sum(ta * sum_ck, axis=1, keepdims=True) * (1.0 / (T * HW))      # (bb,1,C)
    max_c = jnp.max(ta * max_ck, axis=1, keepdims=True)                         # (bb,1,C)
    ca_row = jax.nn.sigmoid(mlp_row(avg_c) + mlp_row(max_c))                    # (bb,1,C)

    # (1, C) row -> (C, 1) column with a VPU-only identity trick (no XLU transpose).
    ii = jax.lax.broadcasted_iota(jnp.int32, (C, C), 0)
    jj = jax.lax.broadcasted_iota(jnp.int32, (C, C), 1)
    eye = (ii == jj).astype(f32)                                                # (C, C)
    ca_col = jnp.sum(eye[None] * ca_row, axis=2, keepdims=True)                 # (bb,C,1)

    # As in the PyTorch code, the (B, C, 1, 1, 1) channel gate broadcasts against
    # dim 1 (= time) of the (B, T, C, H, W) tensor, which requires C == T.
    g = ta * ca_col                                                             # (bb,T,1) > 0

    # ---- SpatialAttention on out2 = g * x (never materialized) ----
    avg_map = jnp.sum(g * sum_tk, axis=1, keepdims=True) * (1.0 / (T * C))      # (bb,1,HW)
    max_map = jnp.max(g * max_tk, axis=1, keepdims=True)                        # (bb,1,HW)

    # 3x3 conv (padding=1, cross-correlation) in flattened HW space via a
    # zero-padded scratch + 9 static shifted slices.  Row out-of-range reads land
    # in the zero pad; column wrap-around is masked with a lane-position mask.
    pad_ref[...] = jnp.zeros_like(pad_ref)
    pad_ref[:, 0:1, w + 1: w + 1 + HW] = avg_map
    pad_ref[:, 1:2, w + 1: w + 1 + HW] = max_map

    col = jax.lax.broadcasted_iota(jnp.int32, (1, 1, HW), 2)
    jpos = col % w                                                              # (1,1,HW)

    s = jnp.zeros((bb, 1, HW), f32)
    for di in (-1, 0, 1):
        for dj in (-1, 0, 1):
            start = (w + 1) + di * w + dj
            win = pad_ref[:, :, start: start + HW]                              # (bb,2,HW)
            w_avg = wsa_ref[0 * 9 + (di + 1) * 3 + (dj + 1)]                    # SMEM scalar
            w_max = wsa_ref[1 * 9 + (di + 1) * 3 + (dj + 1)]
            contrib = w_avg * win[:, 0:1, :] + w_max * win[:, 1:2, :]           # (bb,1,HW)
            if dj == 0:
                s = s + contrib
            else:
                valid = (jpos + dj >= 0) & (jpos + dj < w)
                s = s + jnp.where(valid, contrib, 0.0)

    sa = jax.nn.sigmoid(s)                                                      # (bb,1,HW)

    # ---- fused gate + single broadcast multiply over C + final ReLU ----
    gate = (g * sa).astype(x.dtype)                                             # (bb,T,HW)
    o_ref[...] = jnp.maximum(x * gate[:, :, None, :], 0.0).astype(o_ref.dtype)


def _pick_batch_block(batch, per_batch_bytes,
                      target_bytes=512 * 1024, max_bytes=4 * 1024 * 1024):
    """Largest divisor of `batch` keeping the block <= max_bytes, aiming >= target."""
    best = 1
    for cand in range(1, batch + 1):
        if batch % cand:
            continue
        if cand * per_batch_bytes > max_bytes:
            break
        best = cand
        if cand * per_batch_bytes >= target_bytes:
            break
    return best


def tcsa(x, ta_w1, ta_w2, ca_w1, ca_w2, sa_w, *, batch_block=None):
    """Fused TCSA forward.  Weight shapes (1x1x1 conv kernels squeezed):
       ta_w1 (T//4, T), ta_w2 (T, T//4), ca_w1 (C//5, C), ca_w2 (C, C//5),
       sa_w (1, 2, 3, 3)."""
    B, T, C, H, W = x.shape
    HW = H * W
    assert C == T, ("The PyTorch TCSA broadcasts the (B,C,1,1,1) channel gate "
                    "against dim 1 (= T); it only runs when channels == timeWindows.")
    assert sa_w.shape == (1, 2, 3, 3)

    x2 = x.reshape(B, T, C, HW)                      # lane-dense last dim (HW)
    ta_w1t = jnp.transpose(ta_w1)                    # (T, Tr)
    ca_w2t = jnp.transpose(ca_w2)                    # (Cr, C)
    wsa_flat = sa_w.reshape(-1).astype(jnp.float32)  # (18,) -> SMEM scalars

    per_batch_bytes = T * C * HW * x.dtype.itemsize
    bb = batch_block if batch_block is not None else _pick_batch_block(B, per_batch_bytes)
    assert B % bb == 0
    grid = (B // bb,)

    Tr = ta_w1.shape[0]
    Cr = ca_w1.shape[0]

    kernel = functools.partial(_tcsa_kernel, h=H, w=W)
    out = pl.pallas_call(
        kernel,
        out_shape=jax.ShapeDtypeStruct((B, T, C, HW), x.dtype),
        grid_spec=pltpu.PrefetchScalarGridSpec(
            num_scalar_prefetch=0,
            grid=grid,
            in_specs=[
                pl.BlockSpec((bb, T, C, HW), lambda g: (g, 0, 0, 0)),
                pl.BlockSpec((T, Tr), lambda g: (0, 0)),     # ta_w1^T (constant block)
                pl.BlockSpec((T, Tr), lambda g: (0, 0)),     # ta_w2
                pl.BlockSpec((Cr, C), lambda g: (0, 0)),     # ca_w1
                pl.BlockSpec((Cr, C), lambda g: (0, 0)),     # ca_w2^T
                pl.BlockSpec(memory_space=pltpu.MemorySpace.SMEM),   # sa conv weights
            ],
            out_specs=pl.BlockSpec((bb, T, C, HW), lambda g: (g, 0, 0, 0)),
            scratch_shapes=[pltpu.VMEM((bb, 2, HW + 2 * W + 2), jnp.float32)],
        ),
        compiler_params=pltpu.CompilerParams(dimension_semantics=("parallel",)),
    )(x2, ta_w1t, ta_w2, ca_w1, ca_w2t, wsa_flat)
    return out.reshape(B, T, C, H, W)


def tcsa_ref(x, ta_w1, ta_w2, ca_w1, ca_w2, sa_w):
    """Pure-JAX reference that mirrors the PyTorch forward op-for-op
    (including the C==T broadcast of the channel-attention gate)."""
    B, T, C, H, W = x.shape

    def mlp(v, w1, w2):                              # v: (B, N)
        hid = jax.nn.relu(jnp.einsum("rn,bn->br", w1, v))
        return jnp.einsum("nr,br->bn", w2, hid)

    # TimeAttention
    avg_t = x.mean(axis=(2, 3, 4))
    max_t = x.max(axis=(2, 3, 4))
    ta = jax.nn.sigmoid(mlp(avg_t, ta_w1, ta_w2) + mlp(max_t, ta_w1, ta_w2))    # (B, T)
    out1 = x * ta[:, :, None, None, None]
    # ChannelAttention (output (B, C, 1, 1, 1) broadcasts along dim 1 == T)
    avg_c = out1.mean(axis=(1, 3, 4))
    max_c = out1.max(axis=(1, 3, 4))
    ca = jax.nn.sigmoid(mlp(avg_c, ca_w1, ca_w2) + mlp(max_c, ca_w1, ca_w2))    # (B, C)
    out2 = out1 * ca[:, :, None, None, None]
    # SpatialAttention
    z = out2.reshape(B, T * C, H, W)
    m = jnp.concatenate([z.mean(axis=1, keepdims=True),
                         z.max(axis=1, keepdims=True)], axis=1)                 # (B,2,H,W)
    s = jax.lax.conv_general_dilated(m, sa_w, window_strides=(1, 1),
                                     padding=((1, 1), (1, 1)),
                                     dimension_numbers=("NCHW", "OIHW", "NCHW"))
    sa = jax.nn.sigmoid(s)[:, :, None, :, :]                                    # (B,1,1,H,W)
    return jax.nn.relu(out2 * sa)


if __name__ == "__main__":
    # timeWindows = 8.  channels must (a) equal timeWindows for the module's own
    # `self.ca(out) * out` broadcast to be valid and (b) be >= 5 so that
    # Conv3d(channels, channels // 5) exists — so channels = 8 here.
    B, T, C, H, W = 2, 8, 8, 16, 16
    Tr, Cr = T // 4, C // 5                          # TimeAttention ratio=4, ChannelAttention ratio=5

    key = jax.random.PRNGKey(0)
    kx, k1, k2, k3, k4, k5 = jax.random.split(key, 6)
    x = jax.random.normal(kx, (B, T, C, H, W), dtype=jnp.float32)
    ta_w1 = 0.4 * jax.random.normal(k1, (Tr, T), dtype=jnp.float32)
    ta_w2 = 0.4 * jax.random.normal(k2, (T, Tr), dtype=jnp.float32)
    ca_w1 = 0.4 * jax.random.normal(k3, (Cr, C), dtype=jnp.float32)
    ca_w2 = 0.4 * jax.random.normal(k4, (C, Cr), dtype=jnp.float32)
    sa_w = 0.4 * jax.random.normal(k5, (1, 2, 3, 3), dtype=jnp.float32)

    out = jax.block_until_ready(tcsa(x, ta_w1, ta_w2, ca_w1, ca_w2, sa_w))
    ref = jax.block_until_ready(tcsa_ref(x, ta_w1, ta_w2, ca_w1, ca_w2, sa_w))

    assert out.shape == x.shape and out.dtype == x.dtype
    assert jnp.allclose(out, ref, atol=2e-5, rtol=2e-5), (
        "mismatch vs reference: max abs diff = %e" % float(jnp.max(jnp.abs(out - ref))))
    print("KERNEL_OK")
</pallas_src>

<mosaic_0001>
module attributes {stable_mosaic.version = 11 : i64} {
  func.func @_tcsa_kernel(%arg0: i32, %arg1: memref<2x8x8x256xf32, #tpu.memory_space<vmem>>, %arg2: memref<8x2xf32, #tpu.memory_space<vmem>>, %arg3: memref<8x2xf32, #tpu.memory_space<vmem>>, %arg4: memref<1x8xf32, #tpu.memory_space<vmem>>, %arg5: memref<1x8xf32, #tpu.memory_space<vmem>>, %arg6: memref<18xf32, #tpu.memory_space<smem>>, %arg7: memref<2x8x8x256xf32, #tpu.memory_space<vmem>>, %arg8: memref<2x2x290xf32, #tpu.memory_space<vmem>>) attributes {dimension_semantics = [#tpu.dimension_semantics<parallel>], iteration_bounds = array<i64: 1>, scalar_prefetch = 0 : i64, scratch_operands = 1 : i64, tpu.core_type = #tpu.core_type<tc>, window_params = [{transform_indices = @transform_0, window_bounds = array<i64: 2, 8, 8, 256>}, {pipeline_mode = #tpu.pipeline_mode<synchronous>, transform_indices = @transform_1, window_bounds = array<i64: 8, 2>}, {pipeline_mode = #tpu.pipeline_mode<synchronous>, transform_indices = @transform_2, window_bounds = array<i64: 8, 2>}, {pipeline_mode = #tpu.pipeline_mode<synchronous>, transform_indices = @transform_3, window_bounds = array<i64: 1, 8>}, {pipeline_mode = #tpu.pipeline_mode<synchronous>, transform_indices = @transform_4, window_bounds = array<i64: 1, 8>}, {transform_indices = @transform_5, window_bounds = array<i64: 18>}, {transform_indices = @transform_6, window_bounds = array<i64: 2, 8, 8, 256>}]} {
    %c0 = arith.constant 0 : index
    %c0_0 = arith.constant 0 : index
    %c0_1 = arith.constant 0 : index
    %c0_2 = arith.constant 0 : index
    %0 = vector.load %arg1[%c0, %c0_0, %c0_1, %c0_2] : memref<2x8x8x256xf32, #tpu.memory_space<vmem>>, vector<2x8x8x256xf32>
    %cst = arith.constant dense<0.000000e+00> : vector<2x8x8xf32>
    %1 = vector.multi_reduction <add>, %0, %cst [3] : vector<2x8x8x256xf32> to vector<2x8x8xf32>
    %cst_3 = arith.constant dense<0xFF800000> : vector<2x8x8xf32>
    %2 = vector.multi_reduction <maximumf>, %0, %cst_3 [3] : vector<2x8x8x256xf32> to vector<2x8x8xf32>
    %cst_4 = arith.constant dense<0.000000e+00> : vector<2x8x256xf32>
    %3 = vector.multi_reduction <add>, %0, %cst_4 [2] : vector<2x8x8x256xf32> to vector<2x8x256xf32>
    %cst_5 = arith.constant dense<0xFF800000> : vector<2x8x256xf32>
    %4 = vector.multi_reduction <maximumf>, %0, %cst_5 [2] : vector<2x8x8x256xf32> to vector<2x8x256xf32>
    %c0_6 = arith.constant 0 : index
    %c0_7 = arith.constant 0 : index
    %5 = vector.load %arg2[%c0_6, %c0_7] : memref<8x2xf32, #tpu.memory_space<vmem>>, vector<8x2xf32>
    %c0_8 = arith.constant 0 : index
    %c0_9 = arith.constant 0 : index
    %6 = vector.load %arg3[%c0_8, %c0_9] : memref<8x2xf32, #tpu.memory_space<vmem>>, vector<8x2xf32>
    %cst_10 = arith.constant dense<0.000000e+00> : vector<2x8xf32>
    %7 = vector.multi_reduction <add>, %1, %cst_10 [2] : vector<2x8x8xf32> to vector<2x8xf32>
    %8 = vector.shape_cast %7 : vector<2x8xf32> to vector<2x8x1xf32>
    %cst_11 = arith.constant 4.8828125E-4 : f32
    %9 = vector.broadcast %cst_11 : f32 to vector<2x8x1xf32>
    %10 = arith.mulf %8, %9 : vector<2x8x1xf32>
    %cst_12 = arith.constant dense<0xFF800000> : vector<2x8xf32>
    %11 = vector.multi_reduction <maximumf>, %2, %cst_12 [2] : vector<2x8x8xf32> to vector<2x8xf32>
    %12 = vector.shape_cast %11 : vector<2x8xf32> to vector<2x8x1xf32>
    %13 = vector.shape_cast %5 : vector<8x2xf32> to vector<1x8x2xf32>
    %14 = vector.broadcast %13 : vector<1x8x2xf32> to vector<2x8x2xf32>
    %15 = vector.broadcast %10 : vector<2x8x1xf32> to vector<2x8x2xf32>
    %16 = arith.mulf %14, %15 : vector<2x8x2xf32>
    %cst_13 = arith.constant dense<0.000000e+00> : vector<2x2xf32>
    %17 = vector.multi_reduction <add>, %16, %cst_13 [1] : vector<2x8x2xf32> to vector<2x2xf32>
    %18 = vector.shape_cast %17 : vector<2x2xf32> to vector<2x1x2xf32>
    %cst_14 = arith.constant 0.000000e+00 : f32
    %19 = vector.broadcast %cst_14 : f32 to vector<2x1x2xf32>
    %20 = arith.maximumf %18, %19 : vector<2x1x2xf32>
    %21 = vector.shape_cast %6 : vector<8x2xf32> to vector<1x8x2xf32>
    %22 = vector.broadcast %21 : vector<1x8x2xf32> to vector<2x8x2xf32>
    %23 = vector.broadcast %20 : vector<2x1x2xf32> to vector<2x8x2xf32>
    %24 = arith.mulf %22, %23 : vector<2x8x2xf32>
    %cst_15 = arith.constant dense<0.000000e+00> : vector<2x8xf32>
    %25 = vector.multi_reduction <add>, %24, %cst_15 [2] : vector<2x8x2xf32> to vector<2x8xf32>
    %26 = vector.shape_cast %25 : vector<2x8xf32> to vector<2x8x1xf32>
    %27 = vector.shape_cast %5 : vector<8x2xf32> to vector<1x8x2xf32>
    %28 = vector.broadcast %27 : vector<1x8x2xf32> to vector<2x8x2xf32>
    %29 = vector.broadcast %12 : vector<2x8x1xf32> to vector<2x8x2xf32>
    %30 = arith.mulf %28, %29 : vector<2x8x2xf32>
    %cst_16 = arith.constant dense<0.000000e+00> : vector<2x2xf32>
    %31 = vector.multi_reduction <add>, %30, %cst_16 [1] : vector<2x8x2xf32> to vector<2x2xf32>
    %32 = vector.shape_cast %31 : vector<2x2xf32> to vector<2x1x2xf32>
    %cst_17 = arith.constant 0.000000e+00 : f32
    %33 = vector.broadcast %cst_17 : f32 to vector<2x1x2xf32>
    %34 = arith.maximumf %32, %33 : vector<2x1x2xf32>
    %35 = vector.shape_cast %6 : vector<8x2xf32> to vector<1x8x2xf32>
    %36 = vector.broadcast %35 : vector<1x8x2xf32> to vector<2x8x2xf32>
    %37 = vector.broadcast %34 : vector<2x1x2xf32> to vector<2x8x2xf32>
    %38 = arith.mulf %36, %37 : vector<2x8x2xf32>
    %cst_18 = arith.constant dense<0.000000e+00> : vector<2x8xf32>
    %39 = vector.multi_reduction <add>, %38, %cst_18 [2] : vector<2x8x2xf32> to vector<2x8xf32>
    %40 = vector.shape_cast %39 : vector<2x8xf32> to vector<2x8x1xf32>
    %41 = arith.addf %26, %40 : vector<2x8x1xf32>
    %42 = arith.negf %41 : vector<2x8x1xf32>
    %43 = math.exp %42 : vector<2x8x1xf32>
    %cst_19 = arith.constant 1.000000e+00 : f32
    %44 = vector.broadcast %cst_19 : f32 to vector<2x8x1xf32>
    %45 = arith.addf %44, %43 : vector<2x8x1xf32>
    %46 = arith.divf %44, %45 : vector<2x8x1xf32>
    %c0_20 = arith.constant 0 : index
    %c0_21 = arith.constant 0 : index
    %47 = vector.load %arg4[%c0_20, %c0_21] : memref<1x8xf32, #tpu.memory_space<vmem>>, vector<1x8xf32>
    %c0_22 = arith.constant 0 : index
    %c0_23 = arith.constant 0 : index
    %48 = vector.load %arg5[%c0_22, %c0_23] : memref<1x8xf32, #tpu.memory_space<vmem>>, vector<1x8xf32>
    %49 = vector.broadcast %46 : vector<2x8x1xf32> to vector<2x8x8xf32>
    %50 = arith.mulf %49, %1 : vector<2x8x8xf32>
    %cst_24 = arith.constant dense<0.000000e+00> : vector<2x8xf32>
    %51 = vector.multi_reduction <add>, %50, %cst_24 [1] : vector<2x8x8xf32> to vector<2x8xf32>
    %52 = vector.shape_cast %51 : vector<2x8xf32> to vector<2x1x8xf32>
    %cst_25 = arith.constant 4.8828125E-4 : f32
    %53 = vector.broadcast %cst_25 : f32 to vector<2x1x8xf32>
    %54 = arith.mulf %52, %53 : vector<2x1x8xf32>
    %55 = vector.broadcast %46 : vector<2x8x1xf32> to vector<2x8x8xf32>
    %56 = arith.mulf %55, %2 : vector<2x8x8xf32>
    %cst_26 = arith.constant dense<0xFF800000> : vector<2x8xf32>
    %57 = vector.multi_reduction <maximumf>, %56, %cst_26 [1] : vector<2x8x8xf32> to vector<2x8xf32>
    %58 = vector.shape_cast %57 : vector<2x8xf32> to vector<2x1x8xf32>
    %59 = vector.shape_cast %47 : vector<1x8xf32> to vector<1x1x8xf32>
    %60 = vector.broadcast %59 : vector<1x1x8xf32> to vector<2x1x8xf32>
    %61 = arith.mulf %60, %54 : vector<2x1x8xf32>
    %cst_27 = arith.constant dense<0.000000e+00> : vector<2x1xf32>
    %62 = vector.multi_reduction <add>, %61, %cst_27 [2] : vector<2x1x8xf32> to vector<2x1xf32>
    %63 = vector.shape_cast %62 : vector<2x1xf32> to vector<2x1x1xf32>
    %cst_28 = arith.constant 0.000000e+00 : f32
    %64 = vector.broadcast %cst_28 : f32 to vector<2x1x1xf32>
    %65 = arith.maximumf %63, %64 : vector<2x1x1xf32>
    %66 = vector.shape_cast %48 : vector<1x8xf32> to vector<1x1x8xf32>
    %67 = vector.broadcast %66 : vector<1x1x8xf32> to vector<2x1x8xf32>
    %68 = vector.broadcast %65 : vector<2x1x1xf32> to vector<2x1x8xf32>
    %69 = arith.mulf %67, %68 : vector<2x1x8xf32>
    %cst_29 = arith.constant dense<0.000000e+00> : vector<2x8xf32>
    %70 = vector.multi_reduction <add>, %69, %cst_29 [1] : vector<2x1x8xf32> to vector<2x8xf32>
    %71 = vector.shape_cast %70 : vector<2x8xf32> to vector<2x1x8xf32>
    %72 = vector.shape_cast %47 : vector<1x8xf32> to vector<1x1x8xf32>
    %73 = vector.broadcast %72 : vector<1x1x8xf32> to vector<2x1x8xf32>
    %74 = arith.mulf %73, %58 : vector<2x1x8xf32>
    %cst_30 = arith.constant dense<0.000000e+00> : vector<2x1xf32>
    %75 = vector.multi_reduction <add>, %74, %cst_30 [2] : vector<2x1x8xf32> to vector<2x1xf32>
    %76 = vector.shape_cast %75 : vector<2x1xf32> to vector<2x1x1xf32>
    %cst_31 = arith.constant 0.000000e+00 : f32
    %77 = vector.broadcast %cst_31 : f32 to vector<2x1x1xf32>
    %78 = arith.maximumf %76, %77 : vector<2x1x1xf32>
    %79 = vector.shape_cast %48 : vector<1x8xf32> to vector<1x1x8xf32>
    %80 = vector.broadcast %79 : vector<1x1x8xf32> to vector<2x1x8xf32>
    %81 = vector.broadcast %78 : vector<2x1x1xf32> to vector<2x1x8xf32>
    %82 = arith.mulf %80, %81 : vector<2x1x8xf32>
    %cst_32 = arith.constant dense<0.000000e+00> : vector<2x8xf32>
    %83 = vector.multi_reduction <add>, %82, %cst_32 [1] : vector<2x1x8xf32> to vector<2x8xf32>
    %84 = vector.shape_cast %83 : vector<2x8xf32> to vector<2x1x8xf32>
    %85 = arith.addf %71, %84 : vector<2x1x8xf32>
    %86 = arith.negf %85 : vector<2x1x8xf32>
    %87 = math.exp %86 : vector<2x1x8xf32>
    %cst_33 = arith.constant 1.000000e+00 : f32
    %88 = vector.broadcast %cst_33 : f32 to vector<2x1x8xf32>
    %89 = arith.addf %88, %87 : vector<2x1x8xf32>
    %90 = arith.divf %88, %89 : vector<2x1x8xf32>
    %91 = tpu.iota {dimensions = array<i32: 0>} : vector<8x8xi32>
    %92 = tpu.iota {dimensions = array<i32: 1>} : vector<8x8xi32>
    %93 = arith.cmpi eq, %91, %92 : vector<8x8xi32>
    %94 = arith.extui %93 : vector<8x8xi1> to vector<8x8xi32>
    %95 = arith.sitofp %94 : vector<8x8xi32> to vector<8x8xf32>
    %96 = vector.shape_cast %95 : vector<8x8xf32> to vector<1x8x8xf32>
    %97 = vector.broadcast %96 : vector<1x8x8xf32> to vector<2x8x8xf32>
    %98 = vector.broadcast %90 : vector<2x1x8xf32> to vector<2x8x8xf32>
    %99 = arith.mulf %97, %98 : vector<2x8x8xf32>
    %cst_34 = arith.constant dense<0.000000e+00> : vector<2x8xf32>
    %100 = vector.multi_reduction <add>, %99, %cst_34 [2] : vector<2x8x8xf32> to vector<2x8xf32>
    %101 = vector.shape_cast %100 : vector<2x8xf32> to vector<2x8x1xf32>
    %102 = arith.mulf %46, %101 : vector<2x8x1xf32>
    %103 = vector.broadcast %102 : vector<2x8x1xf32> to vector<2x8x256xf32>
    %104 = arith.mulf %103, %3 : vector<2x8x256xf32>
    %cst_35 = arith.constant dense<0.000000e+00> : vector<2x256xf32>
    %105 = vector.multi_reduction <add>, %104, %cst_35 [1] : vector<2x8x256xf32> to vector<2x256xf32>
    %106 = vector.shape_cast %105 : vector<2x256xf32> to vector<2x1x256xf32>
    %cst_36 = arith.constant 1.562500e-02 : f32
    %107 = vector.broadcast %cst_36 : f32 to vector<2x1x256xf32>
    %108 = arith.mulf %106, %107 : vector<2x1x256xf32>
    %109 = vector.broadcast %102 : vector<2x8x1xf32> to vector<2x8x256xf32>
    %110 = arith.mulf %109, %4 : vector<2x8x256xf32>
    %cst_37 = arith.constant dense<0xFF800000> : vector<2x256xf32>
    %111 = vector.multi_reduction <maximumf>, %110, %cst_37 [1] : vector<2x8x256xf32> to vector<2x256xf32>
    %112 = vector.shape_cast %111 : vector<2x256xf32> to vector<2x1x256xf32>
    %cst_38 = arith.constant 0.000000e+00 : f32
    %113 = vector.broadcast %cst_38 : f32 to vector<2x2x290xf32>
    %c0_39 = arith.constant 0 : index
    %c0_40 = arith.constant 0 : index
    %c0_41 = arith.constant 0 : index
    %114 = vector.load %arg8[%c0_39, %c0_40, %c0_41] : memref<2x2x290xf32, #tpu.memory_space<vmem>>, vector<2x2x290xf32>
    tpu.vector_store %arg8[%c0_39, %c0_40, %c0_41], %113 {strides = array<i32>} : memref<2x2x290xf32, #tpu.memory_space<vmem>>, vector<2x2x290xf32>,
    %c0_42 = arith.constant 0 : index
    %c0_43 = arith.constant 0 : index
    %c17 = arith.constant 17 : index
    %115 = vector.load %arg8[%c0_42, %c0_43, %c17] : memref<2x2x290xf32, #tpu.memory_space<vmem>>, vector<2x1x256xf32>
    tpu.vector_store %arg8[%c0_42, %c0_43, %c17], %108 {strides = array<i32>} : memref<2x2x290xf32, #tpu.memory_space<vmem>>, vector<2x1x256xf32>,
    %c0_44 = arith.constant 0 : index
    %c1 = arith.constant 1 : index
    %c17_45 = arith.constant 17 : index
    %116 = vector.load %arg8[%c0_44, %c1, %c17_45] : memref<2x2x290xf32, #tpu.memory_space<vmem>>, vector<2x1x256xf32>
    tpu.vector_store %arg8[%c0_44, %c1, %c17_45], %112 {strides = array<i32>} : memref<2x2x290xf32, #tpu.memory_space<vmem>>, vector<2x1x256xf32>,
    %117 = tpu.iota {dimensions = array<i32: 2>} : vector<1x1x256xi32>
    %c16_i32 = arith.constant 16 : i32
    %c0_i32 = arith.constant 0 : i32
    %118 = arith.cmpi eq, %c16_i32, %c0_i32 : i32
    %c1_i32 = arith.constant 1 : i32
    %119 = arith.select %118, %c1_i32, %c16_i32 : i32
    %120 = vector.broadcast %119 : i32 to vector<1x1x256xi32>
    %121 = arith.remsi %117, %120 : vector<1x1x256xi32>
    %c0_i32_46 = arith.constant 0 : i32
    %122 = vector.broadcast %c0_i32_46 : i32 to vector<1x1x256xi32>
    %123 = arith.cmpi ne, %121, %122 : vector<1x1x256xi32>
    %c0_i32_47 = arith.constant 0 : i32
    %124 = vector.broadcast %c0_i32_47 : i32 to vector<1x1x256xi32>
    %125 = arith.cmpi slt, %121, %124 : vector<1x1x256xi32>
    %c0_i32_48 = arith.constant 0 : i32
    %126 = arith.cmpi slt, %119, %c0_i32_48 : i32
    %127 = vector.broadcast %126 : i1 to vector<1x1x256xi1>
    %128 = vector.broadcast %127 : vector<1x1x256xi1> to vector<1x1x256xi1>
    %129 = arith.xori %125, %128 : vector<1x1x256xi1>
    %130 = arith.andi %129, %123 : vector<1x1x256xi1>
    %131 = vector.broadcast %119 : i32 to vector<1x1x256xi32>
    %132 = arith.addi %121, %131 : vector<1x1x256xi32>
    %133 = arith.select %130, %132, %121 : vector<1x1x256xi1>, vector<1x1x256xi32>
    %cst_49 = arith.constant 0.000000e+00 : f32
    %134 = vector.broadcast %cst_49 : f32 to vector<2x1x256xf32>
    %c0_50 = arith.constant 0 : index
    %c0_51 = arith.constant 0 : index
    %c0_52 = arith.constant 0 : index
    %135 = vector.load %arg8[%c0_50, %c0_51, %c0_52] : memref<2x2x290xf32, #tpu.memory_space<vmem>>, vector<2x2x256xf32>
    %c0_53 = arith.constant 0 : index
    %136 = memref.load %arg6[%c0_53] : memref<18xf32, #tpu.memory_space<smem>>
    %c9 = arith.constant 9 : index
    %137 = memref.load %arg6[%c9] : memref<18xf32, #tpu.memory_space<smem>>
    %138 = vector.extract_strided_slice %135 {offsets = [0, 0, 0], sizes = [2, 1, 256], strides = [1, 1, 1]} : vector<2x2x256xf32> to vector<2x1x256xf32>
    %139 = vector.broadcast %136 : f32 to vector<2x1x256xf32>
    %140 = arith.mulf %139, %138 : vector<2x1x256xf32>
    %141 = vector.extract_strided_slice %135 {offsets = [0, 1, 0], sizes = [2, 1, 256], strides = [1, 1, 1]} : vector<2x2x256xf32> to vector<2x1x256xf32>
    %142 = vector.broadcast %137 : f32 to vector<2x1x256xf32>
    %143 = arith.mulf %142, %141 : vector<2x1x256xf32>
    %144 = arith.addf %140, %143 : vector<2x1x256xf32>
    %c-1_i32 = arith.constant -1 : i32
    %145 = vector.broadcast %c-1_i32 : i32 to vector<1x1x256xi32>
    %146 = arith.addi %133, %145 : vector<1x1x256xi32>
    %c0_i32_54 = arith.constant 0 : i32
    %147 = vector.broadcast %c0_i32_54 : i32 to vector<1x1x256xi32>
    %148 = arith.cmpi sge, %146, %147 : vector<1x1x256xi32>
    %c-1_i32_55 = arith.constant -1 : i32
    %149 = vector.broadcast %c-1_i32_55 : i32 to vector<1x1x256xi32>
    %150 = arith.addi %133, %149 : vector<1x1x256xi32>
    %c16_i32_56 = arith.constant 16 : i32
    %151 = vector.broadcast %c16_i32_56 : i32 to vector<1x1x256xi32>
    %152 = arith.cmpi slt, %150, %151 : vector<1x1x256xi32>
    %153 = arith.andi %148, %152 : vector<1x1x256xi1>
    %cst_57 = arith.constant 0.000000e+00 : f32
    %154 = vector.shape_cast %153 : vector<1x1x256xi1> to vector<1x1x256xi1>
    %155 = vector.broadcast %154 : vector<1x1x256xi1> to vector<2x1x256xi1>
    %156 = vector.broadcast %cst_57 : f32 to vector<2x1x256xf32>
    %157 = arith.select %155, %144, %156 : vector<2x1x256xi1>, vector<2x1x256xf32>
    %158 = arith.addf %134, %157 : vector<2x1x256xf32>
    %c0_58 = arith.constant 0 : index
    %c0_59 = arith.constant 0 : index
    %c1_60 = arith.constant 1 : index
    %159 = vector.load %arg8[%c0_58, %c0_59, %c1_60] : memref<2x2x290xf32, #tpu.memory_space<vmem>>, vector<2x2x256xf32>
    %c1_61 = arith.constant 1 : index
    %160 = memref.load %arg6[%c1_61] : memref<18xf32, #tpu.memory_space<smem>>
    %c10 = arith.constant 10 : index
    %161 = memref.load %arg6[%c10] : memref<18xf32, #tpu.memory_space<smem>>
    %162 = vector.extract_strided_slice %159 {offsets = [0, 0, 0], sizes = [2, 1, 256], strides = [1, 1, 1]} : vector<2x2x256xf32> to vector<2x1x256xf32>
    %163 = vector.broadcast %160 : f32 to vector<2x1x256xf32>
    %164 = arith.mulf %163, %162 : vector<2x1x256xf32>
    %165 = vector.extract_strided_slice %159 {offsets = [0, 1, 0], sizes = [2, 1, 256], strides = [1, 1, 1]} : vector<2x2x256xf32> to vector<2x1x256xf32>
    %166 = vector.broadcast %161 : f32 to vector<2x1x256xf32>
    %167 = arith.mulf %166, %165 : vector<2x1x256xf32>
    %168 = arith.addf %164, %167 : vector<2x1x256xf32>
    %169 = arith.addf %158, %168 : vector<2x1x256xf32>
    %c0_62 = arith.constant 0 : index
    %c0_63 = arith.constant 0 : index
    %c2 = arith.constant 2 : index
    %170 = vector.load %arg8[%c0_62, %c0_63, %c2] : memref<2x2x290xf32, #tpu.memory_space<vmem>>, vector<2x2x256xf32>
    %c2_64 = arith.constant 2 : index
    %171 = memref.load %arg6[%c2_64] : memref<18xf32, #tpu.memory_space<smem>>
    %c11 = arith.constant 11 : index
    %172 = memref.load %arg6[%c11] : memref<18xf32, #tpu.memory_space<smem>>
    %173 = vector.extract_strided_slice %170 {offsets = [0, 0, 0], sizes = [2, 1, 256], strides = [1, 1, 1]} : vector<2x2x256xf32> to vector<2x1x256xf32>
    %174 = vector.broadcast %171 : f32 to vector<2x1x256xf32>
    %175 = arith.mulf %174, %173 : vector<2x1x256xf32>
    %176 = vector.extract_strided_slice %170 {offsets = [0, 1, 0], sizes = [2, 1, 256], strides = [1, 1, 1]} : vector<2x2x256xf32> to vector<2x1x256xf32>
    %177 = vector.broadcast %172 : f32 to vector<2x1x256xf32>
    %178 = arith.mulf %177, %176 : vector<2x1x256xf32>
    %179 = arith.addf %175, %178 : vector<2x1x256xf32>
    %c1_i32_65 = arith.constant 1 : i32
    %180 = vector.broadcast %c1_i32_65 : i32 to vector<1x1x256xi32>
    %181 = arith.addi %133, %180 : vector<1x1x256xi32>
    %c0_i32_66 = arith.constant 0 : i32
    %182 = vector.broadcast %c0_i32_66 : i32 to vector<1x1x256xi32>
    %183 = arith.cmpi sge, %181, %182 : vector<1x1x256xi32>
    %c1_i32_67 = arith.constant 1 : i32
    %184 = vector.broadcast %c1_i32_67 : i32 to vector<1x1x256xi32>
    %185 = arith.addi %133, %184 : vector<1x1x256xi32>
    %c16_i32_68 = arith.constant 16 : i32
    %186 = vector.broadcast %c16_i32_68 : i32 to vector<1x1x256xi32>
    %187 = arith.cmpi slt, %185, %186 : vector<1x1x256xi32>
    %188 = arith.andi %183, %187 : vector<1x1x256xi1>
    %cst_69 = arith.constant 0.000000e+00 : f32
    %189 = vector.shape_cast %188 : vector<1x1x256xi1> to vector<1x1x256xi1>
    %190 = vector.broadcast %189 : vector<1x1x256xi1> to vector<2x1x256xi1>
    %191 = vector.broadcast %cst_69 : f32 to vector<2x1x256xf32>
    %192 = arith.select %190, %179, %191 : vector<2x1x256xi1>, vector<2x1x256xf32>
    %193 = arith.addf %169, %192 : vector<2x1x256xf32>
    %c0_70 = arith.constant 0 : index
    %c0_71 = arith.constant 0 : index
    %c16 = arith.constant 16 : index
    %194 = vector.load %arg8[%c0_70, %c0_71, %c16] : memref<2x2x290xf32, #tpu.memory_space<vmem>>, vector<2x2x256xf32>
    %c3 = arith.constant 3 : index
    %195 = memref.load %arg6[%c3] : memref<18xf32, #tpu.memory_space<smem>>
    %c12 = arith.constant 12 : index
    %196 = memref.load %arg6[%c12] : memref<18xf32, #tpu.memory_space<smem>>
    %197 = vector.extract_strided_slice %194 {offsets = [0, 0, 0], sizes = [2, 1, 256], strides = [1, 1, 1]} : vector<2x2x256xf32> to vector<2x1x256xf32>
    %198 = vector.broadcast %195 : f32 to vector<2x1x256xf32>
    %199 = arith.mulf %198, %197 : vector<2x1x256xf32>
    %200 = vector.extract_strided_slice %194 {offsets = [0, 1, 0], sizes = [2, 1, 256], strides = [1, 1, 1]} : vector<2x2x256xf32> to vector<2x1x256xf32>
    %201 = vector.broadcast %196 : f32 to vector<2x1x256xf32>
    %202 = arith.mulf %201, %200 : vector<2x1x256xf32>
    %203 = arith.addf %199, %202 : vector<2x1x256xf32>
    %c-1_i32_72 = arith.constant -1 : i32
    %204 = vector.broadcast %c-1_i32_72 : i32 to vector<1x1x256xi32>
    %205 = arith.addi %133, %204 : vector<1x1x256xi32>
    %c0_i32_73 = arith.constant 0 : i32
    %206 = vector.broadcast %c0_i32_73 : i32 to vector<1x1x256xi32>
    %207 = arith.cmpi sge, %205, %206 : vector<1x1x256xi32>
    %c-1_i32_74 = arith.constant -1 : i32
    %208 = vector.broadcast %c-1_i32_74 : i32 to vector<1x1x256xi32>
    %209 = arith.addi %133, %208 : vector<1x1x256xi32>
    %c16_i32_75 = arith.constant 16 : i32
    %210 = vector.broadcast %c16_i32_75 : i32 to vector<1x1x256xi32>
    %211 = arith.cmpi slt, %209, %210 : vector<1x1x256xi32>
    %212 = arith.andi %207, %211 : vector<1x1x256xi1>
    %cst_76 = arith.constant 0.000000e+00 : f32
    %213 = vector.shape_cast %212 : vector<1x1x256xi1> to vector<1x1x256xi1>
    %214 = vector.broadcast %213 : vector<1x1x256xi1> to vector<2x1x256xi1>
    %215 = vector.broadcast %cst_76 : f32 to vector<2x1x256xf32>
    %216 = arith.select %214, %203, %215 : vector<2x1x256xi1>, vector<2x1x256xf32>
    %217 = arith.addf %193, %216 : vector<2x1x256xf32>
    %c0_77 = arith.constant 0 : index
    %c0_78 = arith.constant 0 : index
    %c17_79 = arith.constant 17 : index
    %218 = vector.load %arg8[%c0_77, %c0_78, %c17_79] : memref<2x2x290xf32, #tpu.memory_space<vmem>>, vector<2x2x256xf32>
    %c4 = arith.constant 4 : index
    %219 = memref.load %arg6[%c4] : memref<18xf32, #tpu.memory_space<smem>>
    %c13 = arith.constant 13 : index
    %220 = memref.load %arg6[%c13] : memref<18xf32, #tpu.memory_space<smem>>
    %221 = vector.extract_strided_slice %218 {offsets = [0, 0, 0], sizes = [2, 1, 256], strides = [1, 1, 1]} : vector<2x2x256xf32> to vector<2x1x256xf32>
    %222 = vector.broadcast %219 : f32 to vector<2x1x256xf32>
    %223 = arith.mulf %222, %221 : vector<2x1x256xf32>
    %224 = vector.extract_strided_slice %218 {offsets = [0, 1, 0], sizes = [2, 1, 256], strides = [1, 1, 1]} : vector<2x2x256xf32> to vector<2x1x256xf32>
    %225 = vector.broadcast %220 : f32 to vector<2x1x256xf32>
    %226 = arith.mulf %225, %224 : vector<2x1x256xf32>
    %227 = arith.addf %223, %226 : vector<2x1x256xf32>
    %228 = arith.addf %217, %227 : vector<2x1x256xf32>
    %c0_80 = arith.constant 0 : index
    %c0_81 = arith.constant 0 : index
    %c18 = arith.constant 18 : index
    %229 = vector.load %arg8[%c0_80, %c0_81, %c18] : memref<2x2x290xf32, #tpu.memory_space<vmem>>, vector<2x2x256xf32>
    %c5 = arith.constant 5 : index
    %230 = memref.load %arg6[%c5] : memref<18xf32, #tpu.memory_space<smem>>
    %c14 = arith.constant 14 : index
    %231 = memref.load %arg6[%c14] : memref<18xf32, #tpu.memory_space<smem>>
    %232 = vector.extract_strided_slice %229 {offsets = [0, 0, 0], sizes = [2, 1, 256], strides = [1, 1, 1]} : vector<2x2x256xf32> to vector<2x1x256xf32>
    %233 = vector.broadcast %230 : f32 to vector<2x1x256xf32>
    %234 = arith.mulf %233, %232 : vector<2x1x256xf32>
    %235 = vector.extract_strided_slice %229 {offsets = [0, 1, 0], sizes = [2, 1, 256], strides = [1, 1, 1]} : vector<2x2x256xf32> to vector<2x1x256xf32>
    %236 = vector.broadcast %231 : f32 to vector<2x1x256xf32>
    %237 = arith.mulf %236, %235 : vector<2x1x256xf32>
    %238 = arith.addf %234, %237 : vector<2x1x256xf32>
    %c1_i32_82 = arith.constant 1 : i32
    %239 = vector.broadcast %c1_i32_82 : i32 to vector<1x1x256xi32>
    %240 = arith.addi %133, %239 : vector<1x1x256xi32>
    %c0_i32_83 = arith.constant 0 : i32
    %241 = vector.broadcast %c0_i32_83 : i32 to vector<1x1x256xi32>
    %242 = arith.cmpi sge, %240, %241 : vector<1x1x256xi32>
    %c1_i32_84 = arith.constant 1 : i32
    %243 = vector.broadcast %c1_i32_84 : i32 to vector<1x1x256xi32>
    %244 = arith.addi %133, %243 : vector<1x1x256xi32>
    %c16_i32_85 = arith.constant 16 : i32
    %245 = vector.broadcast %c16_i32_85 : i32 to vector<1x1x256xi32>
    %246 = arith.cmpi slt, %244, %245 : vector<1x1x256xi32>
    %247 = arith.andi %242, %246 : vector<1x1x256xi1>
    %cst_86 = arith.constant 0.000000e+00 : f32
    %248 = vector.shape_cast %247 : vector<1x1x256xi1> to vector<1x1x256xi1>
    %249 = vector.broadcast %248 : vector<1x1x256xi1> to vector<2x1x256xi1>
    %250 = vector.broadcast %cst_86 : f32 to vector<2x1x256xf32>
    %251 = arith.select %249, %238, %250 : vector<2x1x256xi1>, vector<2x1x256xf32>
    %252 = arith.addf %228, %251 : vector<2x1x256xf32>
    %c0_87 = arith.constant 0 : index
    %c0_88 = arith.constant 0 : index
    %c32 = arith.constant 32 : index
    %253 = vector.load %arg8[%c0_87, %c0_88, %c32] : memref<2x2x290xf32, #tpu.memory_space<vmem>>, vector<2x2x256xf32>
    %c6 = arith.constant 6 : index
    %254 = memref.load %arg6[%c6] : memref<18xf32, #tpu.memory_space<smem>>
    %c15 = arith.constant 15 : index
    %255 = memref.load %arg6[%c15] : memref<18xf32, #tpu.memory_space<smem>>
    %256 = vector.extract_strided_slice %253 {offsets = [0, 0, 0], sizes = [2, 1, 256], strides = [1, 1, 1]} : vector<2x2x256xf32> to vector<2x1x256xf32>
    %257 = vector.broadcast %254 : f32 to vector<2x1x256xf32>
    %258 = arith.mulf %257, %256 : vector<2x1x256xf32>
    %259 = vector.extract_strided_slice %253 {offsets = [0, 1, 0], sizes = [2, 1, 256], strides = [1, 1, 1]} : vector<2x2x256xf32> to vector<2x1x256xf32>
    %260 = vector.broadcast %255 : f32 to vector<2x1x256xf32>
    %261 = arith.mulf %260, %259 : vector<2x1x256xf32>
    %262 = arith.addf %258, %261 : vector<2x1x256xf32>
    %c-1_i32_89 = arith.constant -1 : i32
    %263 = vector.broadcast %c-1_i32_89 : i32 to vector<1x1x256xi32>
    %264 = arith.addi %133, %263 : vector<1x1x256xi32>
    %c0_i32_90 = arith.constant 0 : i32
    %265 = vector.broadcast %c0_i32_90 : i32 to vector<1x1x256xi32>
    %266 = arith.cmpi sge, %264, %265 : vector<1x1x256xi32>
    %c-1_i32_91 = arith.constant -1 : i32
    %267 = vector.broadcast %c-1_i32_91 : i32 to vector<1x1x256xi32>
    %268 = arith.addi %133, %267 : vector<1x1x256xi32>
    %c16_i32_92 = arith.constant 16 : i32
    %269 = vector.broadcast %c16_i32_92 : i32 to vector<1x1x256xi32>
    %270 = arith.cmpi slt, %268, %269 : vector<1x1x256xi32>
    %271 = arith.andi %266, %270 : vector<1x1x256xi1>
    %cst_93 = arith.constant 0.000000e+00 : f32
    %272 = vector.shape_cast %271 : vector<1x1x256xi1> to vector<1x1x256xi1>
    %273 = vector.broadcast %272 : vector<1x1x256xi1> to vector<2x1x256xi1>
    %274 = vector.broadcast %cst_93 : f32 to vector<2x1x256xf32>
    %275 = arith.select %273, %262, %274 : vector<2x1x256xi1>, vector<2x1x256xf32>
    %276 = arith.addf %252, %275 : vector<2x1x256xf32>
    %c0_94 = arith.constant 0 : index
    %c0_95 = arith.constant 0 : index
    %c33 = arith.constant 33 : index
    %277 = vector.load %arg8[%c0_94, %c0_95, %c33] : memref<2x2x290xf32, #tpu.memory_space<vmem>>, vector<2x2x256xf32>
    %c7 = arith.constant 7 : index
    %278 = memref.load %arg6[%c7] : memref<18xf32, #tpu.memory_space<smem>>
    %c16_96 = arith.constant 16 : index
    %279 = memref.load %arg6[%c16_96] : memref<18xf32, #tpu.memory_space<smem>>
    %280 = vector.extract_strided_slice %277 {offsets = [0, 0, 0], sizes = [2, 1, 256], strides = [1, 1, 1]} : vector<2x2x256xf32> to vector<2x1x256xf32>
    %281 = vector.broadcast %278 : f32 to vector<2x1x256xf32>
    %282 = arith.mulf %281, %280 : vector<2x1x256xf32>
    %283 = vector.extract_strided_slice %277 {offsets = [0, 1, 0], sizes = [2, 1, 256], strides = [1, 1, 1]} : vector<2x2x256xf32> to vector<2x1x256xf32>
    %284 = vector.broadcast %279 : f32 to vector<2x1x256xf32>
    %285 = arith.mulf %284, %283 : vector<2x1x256xf32>
    %286 = arith.addf %282, %285 : vector<2x1x256xf32>
    %287 = arith.addf %276, %286 : vector<2x1x256xf32>
    %c0_97 = arith.constant 0 : index
    %c0_98 = arith.constant 0 : index
    %c34 = arith.constant 34 : index
    %288 = vector.load %arg8[%c0_97, %c0_98, %c34] : memref<2x2x290xf32, #tpu.memory_space<vmem>>, vector<2x2x256xf32>
    %c8 = arith.constant 8 : index
    %289 = memref.load %arg6[%c8] : memref<18xf32, #tpu.memory_space<smem>>
    %c17_99 = arith.constant 17 : index
    %290 = memref.load %arg6[%c17_99] : memref<18xf32, #tpu.memory_space<smem>>
    %291 = vector.extract_strided_slice %288 {offsets = [0, 0, 0], sizes = [2, 1, 256], strides = [1, 1, 1]} : vector<2x2x256xf32> to vector<2x1x256xf32>
    %292 = vector.broadcast %289 : f32 to vector<2x1x256xf32>
    %293 = arith.mulf %292, %291 : vector<2x1x256xf32>
    %294 = vector.extract_strided_slice %288 {offsets = [0, 1, 0], sizes = [2, 1, 256], strides = [1, 1, 1]} : vector<2x2x256xf32> to vector<2x1x256xf32>
    %295 = vector.broadcast %290 : f32 to vector<2x1x256xf32>
    %296 = arith.mulf %295, %294 : vector<2x1x256xf32>
    %297 = arith.addf %293, %296 : vector<2x1x256xf32>
    %c1_i32_100 = arith.constant 1 : i32
    %298 = vector.broadcast %c1_i32_100 : i32 to vector<1x1x256xi32>
    %299 = arith.addi %133, %298 : vector<1x1x256xi32>
    %c0_i32_101 = arith.constant 0 : i32
    %300 = vector.broadcast %c0_i32_101 : i32 to vector<1x1x256xi32>
    %301 = arith.cmpi sge, %299, %300 : vector<1x1x256xi32>
    %c1_i32_102 = arith.constant 1 : i32
    %302 = vector.broadcast %c1_i32_102 : i32 to vector<1x1x256xi32>
    %303 = arith.addi %133, %302 : vector<1x1x256xi32>
    %c16_i32_103 = arith.constant 16 : i32
    %304 = vector.broadcast %c16_i32_103 : i32 to vector<1x1x256xi32>
    %305 = arith.cmpi slt, %303, %304 : vector<1x1x256xi32>
    %306 = arith.andi %301, %305 : vector<1x1x256xi1>
    %cst_104 = arith.constant 0.000000e+00 : f32
    %307 = vector.shape_cast %306 : vector<1x1x256xi1> to vector<1x1x256xi1>
    %308 = vector.broadcast %307 : vector<1x1x256xi1> to vector<2x1x256xi1>
    %309 = vector.broadcast %cst_104 : f32 to vector<2x1x256xf32>
    %310 = arith.select %308, %297, %309 : vector<2x1x256xi1>, vector<2x1x256xf32>
    %311 = arith.addf %287, %310 : vector<2x1x256xf32>
    %312 = arith.negf %311 : vector<2x1x256xf32>
    %313 = math.exp %312 : vector<2x1x256xf32>
    %cst_105 = arith.constant 1.000000e+00 : f32
    %314 = vector.broadcast %cst_105 : f32 to vector<2x1x256xf32>
    %315 = arith.addf %314, %313 : vector<2x1x256xf32>
    %316 = arith.divf %314, %315 : vector<2x1x256xf32>
    %317 = vector.broadcast %102 : vector<2x8x1xf32> to vector<2x8x256xf32>
    %318 = vector.broadcast %316 : vector<2x1x256xf32> to vector<2x8x256xf32>
    %319 = arith.mulf %317, %318 : vector<2x8x256xf32>
    %320 = vector.shape_cast %319 : vector<2x8x256xf32> to vector<2x8x1x256xf32>
    %321 = vector.broadcast %320 : vector<2x8x1x256xf32> to vector<2x8x8x256xf32>
    %322 = arith.mulf %0, %321 : vector<2x8x8x256xf32>
    %cst_106 = arith.constant 0.000000e+00 : f32
    %323 = vector.broadcast %cst_106 : f32 to vector<2x8x8x256xf32>
    %324 = arith.maximumf %322, %323 : vector<2x8x8x256xf32>
    %c0_107 = arith.constant 0 : index
    %c0_108 = arith.constant 0 : index
    %c0_109 = arith.constant 0 : index
    %c0_110 = arith.constant 0 : index
    %325 = vector.load %arg7[%c0_107, %c0_108, %c0_109, %c0_110] : memref<2x8x8x256xf32, #tpu.memory_space<vmem>>, vector<2x8x8x256xf32>
    tpu.vector_store %arg7[%c0_107, %c0_108, %c0_109, %c0_110], %324 {strides = array<i32>} : memref<2x8x8x256xf32, #tpu.memory_space<vmem>>, vector<2x8x8x256xf32>,
    return
  }
  func.func @transform_0(%arg0: i32) -> (i32, i32, i32, i32) {
    %c0_i32 = arith.constant 0 : i32
    %c0_i32_0 = arith.constant 0 : i32
    %c0_i32_1 = arith.constant 0 : i32
    %c0_i32_2 = arith.constant 0 : i32
    return %arg0, %c0_i32, %c0_i32_0, %c0_i32_1 : i32, i32, i32, i32
  }
  func.func @transform_1(%arg0: i32) -> (i32, i32) {
    %c0_i32 = arith.constant 0 : i32
    %c0_i32_0 = arith.constant 0 : i32
    %c0_i32_1 = arith.constant 0 : i32
    return %c0_i32, %c0_i32_0 : i32, i32
  }
  func.func @transform_2(%arg0: i32) -> (i32, i32) {
    %c0_i32 = arith.constant 0 : i32
    %c0_i32_0 = arith.constant 0 : i32
    %c0_i32_1 = arith.constant 0 : i32
    return %c0_i32, %c0_i32_0 : i32, i32
  }
  func.func @transform_3(%arg0: i32) -> (i32, i32) {
    %c0_i32 = arith.constant 0 : i32
    %c0_i32_0 = arith.constant 0 : i32
    %c0_i32_1 = arith.constant 0 : i32
    return %c0_i32, %c0_i32_0 : i32, i32
  }
  func.func @transform_4(%arg0: i32) -> (i32, i32) {
    %c0_i32 = arith.constant 0 : i32
    %c0_i32_0 = arith.constant 0 : i32
    %c0_i32_1 = arith.constant 0 : i32
    return %c0_i32, %c0_i32_0 : i32, i32
  }
  func.func @transform_5(%arg0: i32) -> i32 {
    %c0_i32 = arith.constant 0 : i32
    %c0_i32_0 = arith.constant 0 : i32
    return %c0_i32 : i32
  }
  func.func @transform_6(%arg0: i32) -> (i32, i32, i32, i32) {
    %c0_i32 = arith.constant 0 : i32
    %c0_i32_0 = arith.constant 0 : i32
    %c0_i32_1 = arith.constant 0 : i32
    %c0_i32_2 = arith.constant 0 : i32
    return %arg0, %c0_i32, %c0_i32_0, %c0_i32_1 : i32, i32, i32, i32
  }
}

</mosaic_0001>

<llo_original>
// kernel: tpu_custom_call.1
$region0: #{tpu_custom_call.1}
  #allocation0 [shape = 'u32[]', space=smem, size = 0x4, offset = 0x4, fixed_abs, tag = 'smem constant byte address 0x4 - core index']
  #allocation1 [shape = 'u32[144,128]{1,0:T(1,128)}', space=vmem, size = 0x12000, scoped, tag = 'internal scratch']
  #allocation2 [shape = 'f32[2,2,290]{2,1,0:T(2,128)}', space=vmem, size = 0x1800, scoped, tag = 'scratch operand']
  %s0 = inlined_call_operand.hbm [shape: f32[2,8,8,256], index: 0, kind: input, shape index: {}]
  %s1 = inlined_call_operand.vmem [shape: f32[8,2], index: 1, kind: input, shape index: {}]
  %s2 = inlined_call_operand.vmem [shape: f32[8,2], index: 2, kind: input, shape index: {}]
  %s3 = inlined_call_operand.vmem [shape: f32[1,8], index: 3, kind: input, shape index: {}]
  %s4 = inlined_call_operand.vmem [shape: f32[1,8], index: 4, kind: input, shape index: {}]
  %s5 = inlined_call_operand.vmem [shape: f32[18], index: 5, kind: input, shape index: {}]
  %s6 = inlined_call_operand.hbm [shape: f32[2,8,8,256], index: 6, kind: output, shape index: {}]
  %s7 = sld [smem:[#allocation0]]
  $region42: #{tpu_custom_call.1} parent=0
    _
  %s9 = ssub.s32 1, %s7
  %s10 = scalar_select 0, %s9, %s7
  $region1: #{tpu_custom_call.1} parent=0
    #allocation3 [shape = 'u8[131072]{0}', space=vmem, size = 0x20000, scoped, tag = 'input window, operand 0, single buffered']
    #allocation4 [shape = 's32[1]{0}', space=sflag, size = 0x4, scoped, tag = 'scoped memory for tpu_custom_call.1']
    #allocation5 [shape = 's32[1]{0}', space=sflag, size = 0x4, scoped, tag = 'scoped memory for tpu_custom_call.1']
    #allocation6 [shape = 's32[1]{0}', space=sflag, size = 0x4, scoped, tag = 'scoped memory for tpu_custom_call.1']
    #allocation7 [shape = 'u8[512]{0}', space=smem, size = 0x200, scoped, tag = 'input window, operand 5, single buffered']
    #allocation8 [shape = 'u8[131072]{0}', space=vmem, size = 0x20000, scoped, tag = 'output window, operand 0, single buffered']
    %11 = vsyncpa [#allocation4], 0
    %12 = vsyncpa [#allocation6], 0
    %13 = vsyncpa [#allocation5], 0
    // Predicated region
    $region2: #{tpu_custom_call.1} parent=1 // pred_check
      _
    $region3: #{tpu_custom_call.1} parent=1 // pred_check_branch
      %15 = sbr.rel (0) target = $region5
    $region4: #{tpu_custom_call.1} parent=1 // pred_region
      %s17 = ssub.s32 4096, 4096
      %18 = vsyncadd [#allocation4], %s17
      %s19 = sshll.u32 [#allocation3], 4
      %s20 = int_to_ptr.vmem [resolvable:$true] %s19
      %25 = dma.hbm_to_vmem [thread:$0]  %s0, 4096, %s20, [#allocation4], 256, 256, 16
    $region5: #{tpu_custom_call.1} parent=1 // pred_fallthru
      _
    // Predicated region
    $region6: #{tpu_custom_call.1} parent=1 // pred_check
      _
    $region7: #{tpu_custom_call.1} parent=1 // pred_check_branch
      %27 = sbr.rel (0) target = $region9
    $region8: #{tpu_custom_call.1} parent=1 // pred_region
      _
    $region9: #{tpu_custom_call.1} parent=1 // pred_fallthru
      _
    // Predicated region
    $region10: #{tpu_custom_call.1} parent=1 // pred_check
      _
    $region11: #{tpu_custom_call.1} parent=1 // pred_check_branch
      %29 = sbr.rel (0) target = $region13
    $region12: #{tpu_custom_call.1} parent=1 // pred_region
      _
    $region13: #{tpu_custom_call.1} parent=1 // pred_fallthru
      _
    // Predicated region
    $region14: #{tpu_custom_call.1} parent=1 // pred_check
      _
    $region15: #{tpu_custom_call.1} parent=1 // pred_check_branch
      %31 = sbr.rel (0) target = $region17
    $region16: #{tpu_custom_call.1} parent=1 // pred_region
      _
    $region17: #{tpu_custom_call.1} parent=1 // pred_fallthru
      _
    // Predicated region
    $region18: #{tpu_custom_call.1} parent=1 // pred_check
      _
    $region19: #{tpu_custom_call.1} parent=1 // pred_check_branch
      %33 = sbr.rel (0) target = $region21
    $region20: #{tpu_custom_call.1} parent=1 // pred_region
      _
    $region21: #{tpu_custom_call.1} parent=1 // pred_fallthru
      _
    // Predicated region
    $region22: #{tpu_custom_call.1} parent=1 // pred_check
      _
    $region23: #{tpu_custom_call.1} parent=1 // pred_check_branch
      %35 = sbr.rel (0) target = $region25
    $region24: #{tpu_custom_call.1} parent=1 // pred_region
      %s37 = ssub.s32 16, 16
      %38 = vsyncadd [#allocation6], %s37
      %s40 = sshll.u32 %s5, 4
      %s41 = int_to_ptr.vmem [resolvable:$true] %s40
      %43 = dma.vmem_to_smem %s41, 16, [#allocation7], [#allocation6]
    $region25: #{tpu_custom_call.1} parent=1 // pred_fallthru
      _
    // Predicated region
    $region26: #{tpu_custom_call.1} parent=1 // pred_check
      _
    $region27: #{tpu_custom_call.1} parent=1 // pred_check_branch
      %45 = sbr.rel (0) target = $region29
    $region28: #{tpu_custom_call.1} parent=1 // pred_region
      %46 = dma.done [#allocation4], 4096
    $region29: #{tpu_custom_call.1} parent=1 // pred_fallthru
      _
    // Predicated region
    $region30: #{tpu_custom_call.1} parent=1 // pred_check
      _
    $region31: #{tpu_custom_call.1} parent=1 // pred_check_branch
      %48 = sbr.rel (0) target = $region33
    $region32: #{tpu_custom_call.1} parent=1 // pred_region
      %49 = dma.done [#allocation6], 16
    $region33: #{tpu_custom_call.1} parent=1 // pred_fallthru
      _
    %50 = sfence
    %v51 = vld [vmem:[#allocation3] sm:$0xff]
    %v52 = vld [vmem:[#allocation3 + $0x8] sm:$0xff]
    %v53 = vld [vmem:[#allocation3 + $0x10] sm:$0xff]
    %v54 = vld [vmem:[#allocation3 + $0x18] sm:$0xff]
    %v55 = vld [vmem:[#allocation3 + $0x20] sm:$0xff]
    %v56 = vld [vmem:[#allocation3 + $0x28] sm:$0xff]
    %v57 = vld [vmem:[#allocation3 + $0x30] sm:$0xff]
    %v58 = vld [vmem:[#allocation3 + $0x38] sm:$0xff]
    %v59 = vld [vmem:[#allocation3 + $0x40] sm:$0xff]
    %v60 = vld [vmem:[#allocation3 + $0x48] sm:$0xff]
    %v61 = vld [vmem:[#allocation3 + $0x50] sm:$0xff]
    %v62 = vld [vmem:[#allocation3 + $0x58] sm:$0xff]
    %v63 = vld [vmem:[#allocation3 + $0x60] sm:$0xff]
    %v64 = vld [vmem:[#allocation3 + $0x68] sm:$0xff]
    %v65 = vld [vmem:[#allocation3 + $0x70] sm:$0xff]
    %v66 = vld [vmem:[#allocation3 + $0x78] sm:$0xff]
    %v67 = vld [vmem:[#allocation3 + $0x80] sm:$0xff]
    %v68 = vld [vmem:[#allocation3 + $0x88] sm:$0xff]
    %v69 = vld [vmem:[#allocation3 + $0x90] sm:$0xff]
    %v70 = vld [vmem:[#allocation3 + $0x98] sm:$0xff]
    %v71 = vld [vmem:[#allocation3 + $0xa0] sm:$0xff]
    %v72 = vld [vmem:[#allocation3 + $0xa8] sm:$0xff]
    %v73 = vld [vmem:[#allocation3 + $0xb0] sm:$0xff]
    %v74 = vld [vmem:[#allocation3 + $0xb8] sm:$0xff]
    %v75 = vld [vmem:[#allocation3 + $0xc0] sm:$0xff]
    %v76 = vld [vmem:[#allocation3 + $0xc8] sm:$0xff]
    %v77 = vld [vmem:[#allocation3 + $0xd0] sm:$0xff]
    %v78 = vld [vmem:[#allocation3 + $0xd8] sm:$0xff]
    %v79 = vld [vmem:[#allocation3 + $0xe0] sm:$0xff]
    %v80 = vld [vmem:[#allocation3 + $0xe8] sm:$0xff]
    %v81 = vld [vmem:[#allocation3 + $0xf0] sm:$0xff]
    %v82 = vld [vmem:[#allocation3 + $0xf8] sm:$0xff]
    %v83 = vadd.f32 %v51, %v52
    %84 = vadd.xlane.f32.xlu0 %v83
    %v85 = vpop.xlane.xlu0 %84
    %v86 = vadd.f32 %v53, %v54
    %87 = vadd.xlane.f32.xlu0 %v86
    %v88 = vpop.xlane.xlu0 %87
    %v89 = vadd.f32 %v55, %v56
    %90 = vadd.xlane.f32.xlu0 %v89
    %v91 = vpop.xlane.xlu0 %90
    %v92 = vadd.f32 %v57, %v58
    %93 = vadd.xlane.f32.xlu0 %v92
    %v94 = vpop.xlane.xlu0 %93
    %v95 = vadd.f32 %v59, %v60
    %96 = vadd.xlane.f32.xlu0 %v95
    %v97 = vpop.xlane.xlu0 %96
    %v98 = vadd.f32 %v61, %v62
    %99 = vadd.xlane.f32.xlu0 %v98
    %v100 = vpop.xlane.xlu0 %99
    %v101 = vadd.f32 %v63, %v64
    %102 = vadd.xlane.f32.xlu0 %v101
    %v103 = vpop.xlane.xlu0 %102
    %v104 = vadd.f32 %v65, %v66
    %105 = vadd.xlane.f32.xlu0 %v104
    %v106 = vpop.xlane.xlu0 %105
    %v107 = vadd.f32 %v67, %v68
    %108 = vadd.xlane.f32.xlu0 %v107
    %v109 = vpop.xlane.xlu0 %108
    %v110 = vadd.f32 %v69, %v70
    %111 = vadd.xlane.f32.xlu0 %v110
    %v112 = vpop.xlane.xlu0 %111
    %v113 = vadd.f32 %v71, %v72
    %114 = vadd.xlane.f32.xlu0 %v113
    %v115 = vpop.xlane.xlu0 %114
    %v116 = vadd.f32 %v73, %v74
    %117 = vadd.xlane.f32.xlu0 %v116
    %v118 = vpop.xlane.xlu0 %117
    %v119 = vadd.f32 %v75, %v76
    %120 = vadd.xlane.f32.xlu0 %v119
    %v121 = vpop.xlane.xlu0 %120
    %v122 = vadd.f32 %v77, %v78
    %123 = vadd.xlane.f32.xlu0 %v122
    %v124 = vpop.xlane.xlu0 %123
    %v125 = vadd.f32 %v79, %v80
    %126 = vadd.xlane.f32.xlu0 %v125
    %v127 = vpop.xlane.xlu0 %126
    %v128 = vadd.f32 %v81, %v82
    %129 = vadd.xlane.f32.xlu0 %v128
    %v130 = vpop.xlane.xlu0 %129
    %v131 = vmax.f32 %v51, %v52
    %132 = vmax.xlane.f32.xlu0 %v131
    %v133 = vpop.xlane.xlu0 %132
    %v134 = vmax.f32 %v53, %v54
    %135 = vmax.xlane.f32.xlu0 %v134
    %v136 = vpop.xlane.xlu0 %135
    %v137 = vmax.f32 %v55, %v56
    %138 = vmax.xlane.f32.xlu0 %v137
    %v139 = vpop.xlane.xlu0 %138
    %v140 = vmax.f32 %v57, %v58
    %141 = vmax.xlane.f32.xlu0 %v140
    %v142 = vpop.xlane.xlu0 %141
    %v143 = vmax.f32 %v59, %v60
    %144 = vmax.xlane.f32.xlu0 %v143
    %v145 = vpop.xlane.xlu0 %144
    %v146 = vmax.f32 %v61, %v62
    %147 = vmax.xlane.f32.xlu0 %v146
    %v148 = vpop.xlane.xlu0 %147
    %v149 = vmax.f32 %v63, %v64
    %150 = vmax.xlane.f32.xlu0 %v149
    %v151 = vpop.xlane.xlu0 %150
    %v152 = vmax.f32 %v65, %v66
    %153 = vmax.xlane.f32.xlu0 %v152
    %v154 = vpop.xlane.xlu0 %153
    %v155 = vmax.f32 %v67, %v68
    %156 = vmax.xlane.f32.xlu0 %v155
    %v157 = vpop.xlane.xlu0 %156
    %v158 = vmax.f32 %v69, %v70
    %159 = vmax.xlane.f32.xlu0 %v158
    %v160 = vpop.xlane.xlu0 %159
    %v161 = vmax.f32 %v71, %v72
    %162 = vmax.xlane.f32.xlu0 %v161
    %v163 = vpop.xlane.xlu0 %162
    %v164 = vmax.f32 %v73, %v74
    %165 = vmax.xlane.f32.xlu0 %v164
    %v166 = vpop.xlane.xlu0 %165
    %v167 = vmax.f32 %v75, %v76
    %168 = vmax.xlane.f32.xlu0 %v167
    %v169 = vpop.xlane.xlu0 %168
    %v170 = vmax.f32 %v77, %v78
    %171 = vmax.xlane.f32.xlu0 %v170
    %v172 = vpop.xlane.xlu0 %171
    %v173 = vmax.f32 %v79, %v80
    %174 = vmax.xlane.f32.xlu0 %v173
    %v175 = vpop.xlane.xlu0 %174
    %v176 = vmax.f32 %v81, %v82
    %177 = vmax.xlane.f32.xlu0 %v176
    %v178 = vpop.xlane.xlu0 %177
    %v179 = vrot.slane %v51, 4
    %v180 = vadd.f32 %v51, %v179
    %v181 = vrot.slane %v180, 2
    %v182 = vadd.f32 %v180, %v181
    %v183 = vrot.slane %v182, 1
    %v184 = vadd.f32 %v182, %v183
    %v185 = vrot.slane %v52, 4
    %v186 = vadd.f32 %v52, %v185
    %v187 = vrot.slane %v186, 2
    %v188 = vadd.f32 %v186, %v187
    %v189 = vrot.slane %v188, 1
    %v190 = vadd.f32 %v188, %v189
    %v191 = vrot.slane %v53, 4
    %v192 = vadd.f32 %v53, %v191
    %v193 = vrot.slane %v192, 2
    %v194 = vadd.f32 %v192, %v193
    %v195 = vrot.slane %v194, 1
    %v196 = vadd.f32 %v194, %v195
    %v197 = vrot.slane %v54, 4
    %v198 = vadd.f32 %v54, %v197
    %v199 = vrot.slane %v198, 2
    %v200 = vadd.f32 %v198, %v199
    %v201 = vrot.slane %v200, 1
    %v202 = vadd.f32 %v200, %v201
    %v203 = vrot.slane %v55, 4
    %v204 = vadd.f32 %v55, %v203
    %v205 = vrot.slane %v204, 2
    %v206 = vadd.f32 %v204, %v205
    %v207 = vrot.slane %v206, 1
    %v208 = vadd.f32 %v206, %v207
    %v209 = vrot.slane %v56, 4
    %v210 = vadd.f32 %v56, %v209
    %v211 = vrot.slane %v210, 2
    %v212 = vadd.f32 %v210, %v211
    %v213 = vrot.slane %v212, 1
    %v214 = vadd.f32 %v212, %v213
    %v215 = vrot.slane %v57, 4
    %v216 = vadd.f32 %v57, %v215
    %v217 = vrot.slane %v216, 2
    %v218 = vadd.f32 %v216, %v217
    %v219 = vrot.slane %v218, 1
    %v220 = vadd.f32 %v218, %v219
    %v221 = vrot.slane %v58, 4
    %v222 = vadd.f32 %v58, %v221
    %v223 = vrot.slane %v222, 2
    %v224 = vadd.f32 %v222, %v223
    %v225 = vrot.slane %v224, 1
    %v226 = vadd.f32 %v224, %v225
    %v227 = vrot.slane %v59, 4
    %v228 = vadd.f32 %v59, %v227
    %v229 = vrot.slane %v228, 2
    %v230 = vadd.f32 %v228, %v229
    %v231 = vrot.slane %v230, 1
    %v232 = vadd.f32 %v230, %v231
    %v233 = vrot.slane %v60, 4
    %v234 = vadd.f32 %v60, %v233
    %v235 = vrot.slane %v234, 2
    %v236 = vadd.f32 %v234, %v235
    %v237 = vrot.slane %v236, 1
    %v238 = vadd.f32 %v236, %v237
    %v239 = vrot.slane %v61, 4
    %v240 = vadd.f32 %v61, %v239
    %v241 = vrot.slane %v240, 2
    %v242 = vadd.f32 %v240, %v241
    %v243 = vrot.slane %v242, 1
    %v244 = vadd.f32 %v242, %v243
    %v245 = vrot.slane %v62, 4
    %v246 = vadd.f32 %v62, %v245
    %v247 = vrot.slane %v246, 2
    %v248 = vadd.f32 %v246, %v247
    %v249 = vrot.slane %v248, 1
    %v250 = vadd.f32 %v248, %v249
    %v251 = vrot.slane %v63, 4
    %v252 = vadd.f32 %v63, %v251
    %v253 = vrot.slane %v252, 2
    %v254 = vadd.f32 %v252, %v253
    %v255 = vrot.slane %v254, 1
    %v256 = vadd.f32 %v254, %v255
    %v257 = vrot.slane %v64, 4
    %v258 = vadd.f32 %v64, %v257
    %v259 = vrot.slane %v258, 2
    %v260 = vadd.f32 %v258, %v259
    %v261 = vrot.slane %v260, 1
    %v262 = vadd.f32 %v260, %v261
    %v263 = vrot.slane %v65, 4
    %v264 = vadd.f32 %v65, %v263
    %v265 = vrot.slane %v264, 2
    %v266 = vadd.f32 %v264, %v265
    %v267 = vrot.slane %v266, 1
    %v268 = vadd.f32 %v266, %v267
    %v269 = vrot.slane %v66, 4
    %v270 = vadd.f32 %v66, %v269
    %v271 = vrot.slane %v270, 2
    %v272 = vadd.f32 %v270, %v271
    %v273 = vrot.slane %v272, 1
    %v274 = vadd.f32 %v272, %v273
    %v275 = vrot.slane %v67, 4
    %v276 = vadd.f32 %v67, %v275
    %v277 = vrot.slane %v276, 2
    %v278 = vadd.f32 %v276, %v277
    %v279 = vrot.slane %v278, 1
    %v280 = vadd.f32 %v278, %v279
    %v281 = vrot.slane %v68, 4
    %v282 = vadd.f32 %v68, %v281
    %v283 = vrot.slane %v282, 2
    %v284 = vadd.f32 %v282, %v283
    %v285 = vrot.slane %v284, 1
    %v286 = vadd.f32 %v284, %v285
    %v287 = vrot.slane %v69, 4
    %v288 = vadd.f32 %v69, %v287
    %v289 = vrot.slane %v288, 2
    %v290 = vadd.f32 %v288, %v289
    %v291 = vrot.slane %v290, 1
    %v292 = vadd.f32 %v290, %v291
    %v293 = vrot.slane %v70, 4
    %v294 = vadd.f32 %v70, %v293
    %v295 = vrot.slane %v294, 2
    %v296 = vadd.f32 %v294, %v295
    %v297 = vrot.slane %v296, 1
    %v298 = vadd.f32 %v296, %v297
    %v299 = vrot.slane %v71, 4
    %v300 = vadd.f32 %v71, %v299
    %v301 = vrot.slane %v300, 2
    %v302 = vadd.f32 %v300, %v301
    %v303 = vrot.slane %v302, 1
    %v304 = vadd.f32 %v302, %v303
    %v305 = vrot.slane %v72, 4
    %v306 = vadd.f32 %v72, %v305
    %v307 = vrot.slane %v306, 2
    %v308 = vadd.f32 %v306, %v307
    %v309 = vrot.slane %v308, 1
    %v310 = vadd.f32 %v308, %v309
    %v311 = vrot.slane %v73, 4
    %v312 = vadd.f32 %v73, %v311
    %v313 = vrot.slane %v312, 2
    %v314 = vadd.f32 %v312, %v313
    %v315 = vrot.slane %v314, 1
    %v316 = vadd.f32 %v314, %v315
    %v317 = vrot.slane %v74, 4
    %v318 = vadd.f32 %v74, %v317
    %v319 = vrot.slane %v318, 2
    %v320 = vadd.f32 %v318, %v319
    %v321 = vrot.slane %v320, 1
    %v322 = vadd.f32 %v320, %v321
    %v323 = vrot.slane %v75, 4
    %v324 = vadd.f32 %v75, %v323
    %v325 = vrot.slane %v324, 2
    %v326 = vadd.f32 %v324, %v325
    %v327 = vrot.slane %v326, 1
    %v328 = vadd.f32 %v326, %v327
    %v329 = vrot.slane %v76, 4
    %v330 = vadd.f32 %v76, %v329
    %v331 = vrot.slane %v330, 2
    %v332 = vadd.f32 %v330, %v331
    %v333 = vrot.slane %v332, 1
    %v334 = vadd.f32 %v332, %v333
    %v335 = vrot.slane %v77, 4
    %v336 = vadd.f32 %v77, %v335
    %v337 = vrot.slane %v336, 2
    %v338 = vadd.f32 %v336, %v337
    %v339 = vrot.slane %v338, 1
    %v340 = vadd.f32 %v338, %v339
    %v341 = vrot.slane %v78, 4
    %v342 = vadd.f32 %v78, %v341
    %v343 = vrot.slane %v342, 2
    %v344 = vadd.f32 %v342, %v343
    %v345 = vrot.slane %v344, 1
    %v346 = vadd.f32 %v344, %v345
    %v347 = vrot.slane %v79, 4
    %v348 = vadd.f32 %v79, %v347
    %v349 = vrot.slane %v348, 2
    %v350 = vadd.f32 %v348, %v349
    %v351 = vrot.slane %v350, 1
    %v352 = vadd.f32 %v350, %v351
    %v353 = vrot.slane %v80, 4
    %v354 = vadd.f32 %v80, %v353
    %v355 = vrot.slane %v354, 2
    %v356 = vadd.f32 %v354, %v355
    %v357 = vrot.slane %v356, 1
    %v358 = vadd.f32 %v356, %v357
    %v359 = vrot.slane %v81, 4
    %v360 = vadd.f32 %v81, %v359
    %v361 = vrot.slane %v360, 2
    %v362 = vadd.f32 %v360, %v361
    %v363 = vrot.slane %v362, 1
    %v364 = vadd.f32 %v362, %v363
    %v365 = vrot.slane %v82, 4
    %v366 = vadd.f32 %v82, %v365
    %v367 = vrot.slane %v366, 2
    %v368 = vadd.f32 %v366, %v367
    %v369 = vrot.slane %v368, 1
    %v370 = vadd.f32 %v368, %v369
    %v371 = vrot.slane %v51, 4
    %v372 = vmax.f32 %v51, %v371
    %v373 = vrot.slane %v372, 2
    %v374 = vmax.f32 %v372, %v373
    %v375 = vrot.slane %v374, 1
    %v376 = vmax.f32 %v374, %v375
    %v377 = vrot.slane %v52, 4
    %v378 = vmax.f32 %v52, %v377
    %v379 = vrot.slane %v378, 2
    %v380 = vmax.f32 %v378, %v379
    %v381 = vrot.slane %v380, 1
    %v382 = vmax.f32 %v380, %v381
    %v383 = vrot.slane %v53, 4
    %v384 = vmax.f32 %v53, %v383
    %v385 = vrot.slane %v384, 2
    %v386 = vmax.f32 %v384, %v385
    %v387 = vrot.slane %v386, 1
    %v388 = vmax.f32 %v386, %v387
    %v389 = vrot.slane %v54, 4
    %v390 = vmax.f32 %v54, %v389
    %v391 = vrot.slane %v390, 2
    %v392 = vmax.f32 %v390, %v391
    %v393 = vrot.slane %v392, 1
    %v394 = vmax.f32 %v392, %v393
    %v395 = vrot.slane %v55, 4
    %v396 = vmax.f32 %v55, %v395
    %v397 = vrot.slane %v396, 2
    %v398 = vmax.f32 %v396, %v397
    %v399 = vrot.slane %v398, 1
    %v400 = vmax.f32 %v398, %v399
    %v401 = vrot.slane %v56, 4
    %v402 = vmax.f32 %v56, %v401
    %v403 = vrot.slane %v402, 2
    %v404 = vmax.f32 %v402, %v403
    %v405 = vrot.slane %v404, 1
    %v406 = vmax.f32 %v404, %v405
    %v407 = vrot.slane %v57, 4
    %v408 = vmax.f32 %v57, %v407
    %v409 = vrot.slane %v408, 2
    %v410 = vmax.f32 %v408, %v409
    %v411 = vrot.slane %v410, 1
    %v412 = vmax.f32 %v410, %v411
    %v413 = vrot.slane %v58, 4
    %v414 = vmax.f32 %v58, %v413
    %v415 = vrot.slane %v414, 2
    %v416 = vmax.f32 %v414, %v415
    %v417 = vrot.slane %v416, 1
    %v418 = vmax.f32 %v416, %v417
    %v419 = vrot.slane %v59, 4
    %v420 = vmax.f32 %v59, %v419
    %v421 = vrot.slane %v420, 2
    %v422 = vmax.f32 %v420, %v421
    %v423 = vrot.slane %v422, 1
    %v424 = vmax.f32 %v422, %v423
    %v425 = vrot.slane %v60, 4
    %v426 = vmax.f32 %v60, %v425
    %v427 = vrot.slane %v426, 2
    %v428 = vmax.f32 %v426, %v427
    %v429 = vrot.slane %v428, 1
    %v430 = vmax.f32 %v428, %v429
    %v431 = vrot.slane %v61, 4
    %v432 = vmax.f32 %v61, %v431
    %v433 = vrot.slane %v432, 2
    %v434 = vmax.f32 %v432, %v433
    %v435 = vrot.slane %v434, 1
    %v436 = vmax.f32 %v434, %v435
    %v437 = vrot.slane %v62, 4
    %v438 = vmax.f32 %v62, %v437
    %v439 = vrot.slane %v438, 2
    %v440 = vmax.f32 %v438, %v439
    %v441 = vrot.slane %v440, 1
    %v442 = vmax.f32 %v440, %v441
    %v443 = vrot.slane %v63, 4
    %v444 = vmax.f32 %v63, %v443
    %v445 = vrot.slane %v444, 2
    %v446 = vmax.f32 %v444, %v445
    %v447 = vrot.slane %v446, 1
    %v448 = vmax.f32 %v446, %v447
    %v449 = vrot.slane %v64, 4
    %v450 = vmax.f32 %v64, %v449
    %v451 = vrot.slane %v450, 2
    %v452 = vmax.f32 %v450, %v451
    %v453 = vrot.slane %v452, 1
    %v454 = vmax.f32 %v452, %v453
    %v455 = vrot.slane %v65, 4
    %v456 = vmax.f32 %v65, %v455
    %v457 = vrot.slane %v456, 2
    %v458 = vmax.f32 %v456, %v457
    %v459 = vrot.slane %v458, 1
    %v460 = vmax.f32 %v458, %v459
    %v461 = vrot.slane %v66, 4
    %v462 = vmax.f32 %v66, %v461
    %v463 = vrot.slane %v462, 2
    %v464 = vmax.f32 %v462, %v463
    %v465 = vrot.slane %v464, 1
    %v466 = vmax.f32 %v464, %v465
    %v467 = vrot.slane %v67, 4
    %v468 = vmax.f32 %v67, %v467
    %v469 = vrot.slane %v468, 2
    %v470 = vmax.f32 %v468, %v469
    %v471 = vrot.slane %v470, 1
    %v472 = vmax.f32 %v470, %v471
    %v473 = vrot.slane %v68, 4
    %v474 = vmax.f32 %v68, %v473
    %v475 = vrot.slane %v474, 2
    %v476 = vmax.f32 %v474, %v475
    %v477 = vrot.slane %v476, 1
    %v478 = vmax.f32 %v476, %v477
    %v479 = vrot.slane %v69, 4
    %v480 = vmax.f32 %v69, %v479
    %v481 = vrot.slane %v480, 2
    %v482 = vmax.f32 %v480, %v481
    %v483 = vrot.slane %v482, 1
    %v484 = vmax.f32 %v482, %v483
    %v485 = vrot.slane %v70, 4
    %v486 = vmax.f32 %v70, %v485
    %v487 = vrot.slane %v486, 2
    %v488 = vmax.f32 %v486, %v487
    %v489 = vrot.slane %v488, 1
    %v490 = vmax.f32 %v488, %v489
    %v491 = vrot.slane %v71, 4
    %v492 = vmax.f32 %v71, %v491
    %v493 = vrot.slane %v492, 2
    %v494 = vmax.f32 %v492, %v493
    %v495 = vrot.slane %v494, 1
    %v496 = vmax.f32 %v494, %v495
    %v497 = vrot.slane %v72, 4
    %v498 = vmax.f32 %v72, %v497
    %v499 = vrot.slane %v498, 2
    %v500 = vmax.f32 %v498, %v499
    %v501 = vrot.slane %v500, 1
    %v502 = vmax.f32 %v500, %v501
    %v503 = vrot.slane %v73, 4
    %v504 = vmax.f32 %v73, %v503
    %v505 = vrot.slane %v504, 2
    %v506 = vmax.f32 %v504, %v505
    %v507 = vrot.slane %v506, 1
    %v508 = vmax.f32 %v506, %v507
    %v509 = vrot.slane %v74, 4
    %v510 = vmax.f32 %v74, %v509
    %v511 = vrot.slane %v510, 2
    %v512 = vmax.f32 %v510, %v511
    %v513 = vrot.slane %v512, 1
    %v514 = vmax.f32 %v512, %v513
    %v515 = vrot.slane %v75, 4
    %v516 = vmax.f32 %v75, %v515
    %v517 = vrot.slane %v516, 2
    %v518 = vmax.f32 %v516, %v517
    %v519 = vrot.slane %v518, 1
    %v520 = vmax.f32 %v518, %v519
    %v521 = vrot.slane %v76, 4
    %v522 = vmax.f32 %v76, %v521
    %v523 = vrot.slane %v522, 2
    %v524 = vmax.f32 %v522, %v523
    %v525 = vrot.slane %v524, 1
    %v526 = vmax.f32 %v524, %v525
    %v527 = vrot.slane %v77, 4
    %v528 = vmax.f32 %v77, %v527
    %v529 = vrot.slane %v528, 2
    %v530 = vmax.f32 %v528, %v529
    %v531 = vrot.slane %v530, 1
    %v532 = vmax.f32 %v530, %v531
    %v533 = vrot.slane %v78, 4
    %v534 = vmax.f32 %v78, %v533
    %v535 = vrot.slane %v534, 2
    %v536 = vmax.f32 %v534, %v535
    %v537 = vrot.slane %v536, 1
    %v538 = vmax.f32 %v536, %v537
    %v539 = vrot.slane %v79, 4
    %v540 = vmax.f32 %v79, %v539
    %v541 = vrot.slane %v540, 2
    %v542 = vmax.f32 %v540, %v541
    %v543 = vrot.slane %v542, 1
    %v544 = vmax.f32 %v542, %v543
    %v545 = vrot.slane %v80, 4
    %v546 = vmax.f32 %v80, %v545
    %v547 = vrot.slane %v546, 2
    %v548 = vmax.f32 %v546, %v547
    %v549 = vrot.slane %v548, 1
    %v550 = vmax.f32 %v548, %v549
    %v551 = vrot.slane %v81, 4
    %v552 = vmax.f32 %v81, %v551
    %v553 = vrot.slane %v552, 2
    %v554 = vmax.f32 %v552, %v553
    %v555 = vrot.slane %v554, 1
    %v556 = vmax.f32 %v554, %v555
    %v557 = vrot.slane %v82, 4
    %v558 = vmax.f32 %v82, %v557
    %v559 = vrot.slane %v558, 2
    %v560 = vmax.f32 %v558, %v559
    %v561 = vrot.slane %v560, 1
    %v562 = vmax.f32 %v560, %v561
    %v563 = vld [vmem:[%s1] sm:$0xff]
    %v564 = vld [vmem:[%s2] sm:$0xff]
    %v581 = vlaneseq
    %v582 = vand.u32 %v581, 127
    %v583 = vlaneseq
    %v584 = vshrl.u32 %v583, 7
    %v585 = vsub.s32 %v582, %v584
    %v586 = vrot.slane %v85, %v585
    %v587 = vlaneseq
    %v588 = vshrl.u32 %v587, 7
    %v589 = vsub.s32 %v582, %v588
    %v590 = vrot.slane %v88, %v589
    %v591 = vlaneseq
    %v592 = vshrl.u32 %v591, 7
    %v593 = vsub.s32 %v582, %v592
    %v594 = vrot.slane %v91, %v593
    %v595 = vlaneseq
    %v596 = vshrl.u32 %v595, 7
    %v597 = vsub.s32 %v582, %v596
    %v598 = vrot.slane %v94, %v597
    %v599 = vlaneseq
    %v600 = vshrl.u32 %v599, 7
    %v601 = vsub.s32 %v582, %v600
    %v602 = vrot.slane %v97, %v601
    %v603 = vlaneseq
    %v604 = vshrl.u32 %v603, 7
    %v605 = vsub.s32 %v582, %v604
    %v606 = vrot.slane %v100, %v605
    %v607 = vlaneseq
    %v608 = vshrl.u32 %v607, 7
    %v609 = vsub.s32 %v582, %v608
    %v610 = vrot.slane %v103, %v609
    %v611 = vlaneseq
    %v612 = vshrl.u32 %v611, 7
    %v613 = vsub.s32 %v582, %v612
    %v614 = vrot.slane %v106, %v613
    %v615 = vlaneseq
    %v616 = vshrl.u32 %v615, 7
    %v617 = vsub.s32 %v582, %v616
    %v618 = vrot.slane %v109, %v617
    %v619 = vlaneseq
    %v620 = vshrl.u32 %v619, 7
    %v621 = vsub.s32 %v582, %v620
    %v622 = vrot.slane %v112, %v621
    %v623 = vlaneseq
    %v624 = vshrl.u32 %v623, 7
    %v625 = vsub.s32 %v582, %v624
    %v626 = vrot.slane %v115, %v625
    %v627 = vlaneseq
    %v628 = vshrl.u32 %v627, 7
    %v629 = vsub.s32 %v582, %v628
    %v630 = vrot.slane %v118, %v629
    %v631 = vlaneseq
    %v632 = vshrl.u32 %v631, 7
    %v633 = vsub.s32 %v582, %v632
    %v634 = vrot.slane %v121, %v633
    %v635 = vlaneseq
    %v636 = vshrl.u32 %v635, 7
    %v637 = vsub.s32 %v582, %v636
    %v638 = vrot.slane %v124, %v637
    %v639 = vlaneseq
    %v640 = vshrl.u32 %v639, 7
    %v641 = vsub.s32 %v582, %v640
    %v642 = vrot.slane %v127, %v641
    %v643 = vlaneseq
    %v644 = vshrl.u32 %v643, 7
    %v645 = vsub.s32 %v582, %v644
    %v646 = vrot.slane %v130, %v645
    %vm647 = vcmask 1041409
    %v648 = vsel %vm647, %v590, %v586
    %vm649 = vcmask 1042434
    %v650 = vsel %vm649, %v594, %v648
    %vm651 = vcmask 1043459
    %v652 = vsel %vm651, %v598, %v650
    %vm653 = vcmask 1044484
    %v654 = vsel %vm653, %v602, %v652
    %vm655 = vcmask 1045509
    %v656 = vsel %vm655, %v606, %v654
    %vm657 = vcmask 1046534
    %v658 = vsel %vm657, %v610, %v656
    %vm659 = vcmask 1047559
    %v660 = vsel %vm659, %v614, %v658
    %v661 = vsel %vm647, %v622, %v618
    %v662 = vsel %vm649, %v626, %v661
    %v663 = vsel %vm651, %v630, %v662
    %v664 = vsel %vm653, %v634, %v663
    %v665 = vsel %vm655, %v638, %v664
    %v666 = vsel %vm657, %v642, %v665
    %v667 = vsel %vm659, %v646, %v666
    %vm670 = vcmask 64512
    %v671 = vsel %vm670, %v660, 0.0
    %672 = vadd.xlane.f32.xlu0 %v671
    %v673 = vpop.xlane.xlu0 %672
    %v674 = vsel %vm670, %v667, 0.0
    %675 = vadd.xlane.f32.xlu0 %v674
    %v676 = vpop.xlane.xlu0 %675
    %v677 = vmul.f32 %v673, 0.00048828125
    %v678 = vmul.f32 %v676, 0.00048828125
    %v695 = vlaneseq
    %v696 = vshrl.u32 %v695, 7
    %v697 = vsub.s32 %v582, %v696
    %v698 = vrot.slane %v133, %v697
    %v699 = vlaneseq
    %v700 = vshrl.u32 %v699, 7
    %v701 = vsub.s32 %v582, %v700
    %v702 = vrot.slane %v136, %v701
    %v703 = vlaneseq
    %v704 = vshrl.u32 %v703, 7
    %v705 = vsub.s32 %v582, %v704
    %v706 = vrot.slane %v139, %v705
    %v707 = vlaneseq
    %v708 = vshrl.u32 %v707, 7
    %v709 = vsub.s32 %v582, %v708
    %v710 = vrot.slane %v142, %v709
    %v711 = vlaneseq
    %v712 = vshrl.u32 %v711, 7
    %v713 = vsub.s32 %v582, %v712
    %v714 = vrot.slane %v145, %v713
    %v715 = vlaneseq
    %v716 = vshrl.u32 %v715, 7
    %v717 = vsub.s32 %v582, %v716
    %v718 = vrot.slane %v148, %v717
    %v719 = vlaneseq
    %v720 = vshrl.u32 %v719, 7
    %v721 = vsub.s32 %v582, %v720
    %v722 = vrot.slane %v151, %v721
    %v723 = vlaneseq
    %v724 = vshrl.u32 %v723, 7
    %v725 = vsub.s32 %v582, %v724
    %v726 = vrot.slane %v154, %v725
    %v727 = vlaneseq
    %v728 = vshrl.u32 %v727, 7
    %v729 = vsub.s32 %v582, %v728
    %v730 = vrot.slane %v157, %v729
    %v731 = vlaneseq
    %v732 = vshrl.u32 %v731, 7
    %v733 = vsub.s32 %v582, %v732
    %v734 = vrot.slane %v160, %v733
    %v735 = vlaneseq
    %v736 = vshrl.u32 %v735, 7
    %v737 = vsub.s32 %v582, %v736
    %v738 = vrot.slane %v163, %v737
    %v739 = vlaneseq
    %v740 = vshrl.u32 %v739, 7
    %v741 = vsub.s32 %v582, %v740
    %v742 = vrot.slane %v166, %v741
    %v743 = vlaneseq
    %v744 = vshrl.u32 %v743, 7
    %v745 = vsub.s32 %v582, %v744
    %v746 = vrot.slane %v169, %v745
    %v747 = vlaneseq
    %v748 = vshrl.u32 %v747, 7
    %v749 = vsub.s32 %v582, %v748
    %v750 = vrot.slane %v172, %v749
    %v751 = vlaneseq
    %v752 = vshrl.u32 %v751, 7
    %v753 = vsub.s32 %v582, %v752
    %v754 = vrot.slane %v175, %v753
    %v755 = vlaneseq
    %v756 = vshrl.u32 %v755, 7
    %v757 = vsub.s32 %v582, %v756
    %v758 = vrot.slane %v178, %v757
    %v759 = vsel %vm647, %v702, %v698
    %v760 = vsel %vm649, %v706, %v759
    %v761 = vsel %vm651, %v710, %v760
    %v762 = vsel %vm653, %v714, %v761
    %v763 = vsel %vm655, %v718, %v762
    %v764 = vsel %vm657, %v722, %v763
    %v765 = vsel %vm659, %v726, %v764
    %v766 = vsel %vm647, %v734, %v730
    %v767 = vsel %vm649, %v738, %v766
    %v768 = vsel %vm651, %v742, %v767
    %v769 = vsel %vm653, %v746, %v768
    %v770 = vsel %vm655, %v750, %v769
    %v771 = vsel %vm657, %v754, %v770
    %v772 = vsel %vm659, %v758, %v771
    %v775 = vsel %vm670, %v765, -inf
    %776 = vmax.xlane.f32.xlu0 %v775
    %v777 = vpop.xlane.xlu0 %776
    %v778 = vsel %vm670, %v772, -inf
    %779 = vmax.xlane.f32.xlu0 %v778
    %v780 = vpop.xlane.xlu0 %779
    %v781 = vmul.f32 %v563, %v677
    %v782 = vmul.f32 %v563, %v678
    %vm783 = vcmask 15360
    %v784 = vsel %vm783, %v781, 0.0
    %v785 = vrot.slane %v784, 4
    %v786 = vadd.f32 %v784, %v785
    %v787 = vrot.slane %v786, 2
    %v788 = vadd.f32 %v786, %v787
    %v789 = vrot.slane %v788, 1
    %v790 = vadd.f32 %v788, %v789
    %v791 = vsel %vm783, %v782, 0.0
    %v792 = vrot.slane %v791, 4
    %v793 = vadd.f32 %v791, %v792
    %v794 = vrot.slane %v793, 2
    %v795 = vadd.f32 %v793, %v794
    %v796 = vrot.slane %v795, 1
    %v797 = vadd.f32 %v795, %v796
    %v798 = vmax.f32 %v790, 0.0
    %v799 = vmax.f32 %v797, 0.0
    %v800 = vmul.f32 %v564, %v798
    %v801 = vmul.f32 %v564, %v799
    %v802 = vsel %vm783, %v800, 0.0
    %803 = vadd.xlane.f32.xlu0 %v802
    %v804 = vpop.xlane.xlu0 %803
    %v805 = vsel %vm783, %v801, 0.0
    %806 = vadd.xlane.f32.xlu0 %v805
    %v807 = vpop.xlane.xlu0 %806
    %v808 = vmul.f32 %v563, %v777
    %v809 = vmul.f32 %v563, %v780
    %v810 = vsel %vm783, %v808, 0.0
    %v811 = vrot.slane %v810, 4
    %v812 = vadd.f32 %v810, %v811
    %v813 = vrot.slane %v812, 2
    %v814 = vadd.f32 %v812, %v813
    %v815 = vrot.slane %v814, 1
    %v816 = vadd.f32 %v814, %v815
    %v817 = vsel %vm783, %v809, 0.0
    %v818 = vrot.slane %v817, 4
    %v819 = vadd.f32 %v817, %v818
    %v820 = vrot.slane %v819, 2
    %v821 = vadd.f32 %v819, %v820
    %v822 = vrot.slane %v821, 1
    %v823 = vadd.f32 %v821, %v822
    %v824 = vmax.f32 %v816, 0.0
    %v825 = vmax.f32 %v823, 0.0
    %v826 = vmul.f32 %v564, %v824
    %v827 = vmul.f32 %v564, %v825
    %v828 = vsel %vm783, %v826, 0.0
    %829 = vadd.xlane.f32.xlu0 %v828
    %v830 = vpop.xlane.xlu0 %829
    %v831 = vsel %vm783, %v827, 0.0
    %832 = vadd.xlane.f32.xlu0 %v831
    %v833 = vpop.xlane.xlu0 %832
    %v834 = vadd.f32 %v804, %v830
    %v835 = vadd.f32 %v807, %v833
    %v836 = vxor.u32 %v834, 2147483648
    %v837 = vxor.u32 %v835, 2147483648
    %v838 = vmul.f32 %v836, 1.442695
    %v839 = vpow.pop %v838
    %v840 = vmul.f32 %v837, 1.442695
    %v841 = vpow.pop %v840
    %v842 = vadd.f32 %v839, 1.0
    %v843 = vadd.f32 %v841, 1.0
    %v844 = vrcp.pop %v842
    %v845 = vmul.f32 1.0, %v844
    %v846 = vrcp.pop %v843
    %v847 = vmul.f32 1.0, %v846
    %v848 = vld [vmem:[%s3] sm:$0x1]
    %v849 = vld [vmem:[%s4] sm:$0x1]
    %v850 = vmul.f32 %v845, %v660
    %v851 = vmul.f32 %v847, %v667
    %v852 = vsel %vm670, %v850, 0.0
    %v853 = vrot.slane %v852, 4
    %v854 = vadd.f32 %v852, %v853
    %v855 = vrot.slane %v854, 2
    %v856 = vadd.f32 %v854, %v855
    %v857 = vrot.slane %v856, 1
    %v858 = vadd.f32 %v856, %v857
    %v859 = vsel %vm670, %v851, 0.0
    %v860 = vrot.slane %v859, 4
    %v861 = vadd.f32 %v859, %v860
    %v862 = vrot.slane %v861, 2
    %v863 = vadd.f32 %v861, %v862
    %v864 = vrot.slane %v863, 1
    %v865 = vadd.f32 %v863, %v864
    %v866 = vmul.f32 %v858, 0.00048828125
    %v867 = vmul.f32 %v865, 0.00048828125
    %v868 = vmul.f32 %v845, %v765
    %v869 = vmul.f32 %v847, %v772
    %v870 = vsel %vm670, %v868, -inf
    %v871 = vrot.slane %v870, 4
    %v872 = vmax.f32 %v870, %v871
    %v873 = vrot.slane %v872, 2
    %v874 = vmax.f32 %v872, %v873
    %v875 = vrot.slane %v874, 1
    %v876 = vmax.f32 %v874, %v875
    %v877 = vsel %vm670, %v869, -inf
    %v878 = vrot.slane %v877, 4
    %v879 = vmax.f32 %v877, %v878
    %v880 = vrot.slane %v879, 2
    %v881 = vmax.f32 %v879, %v880
    %v882 = vrot.slane %v881, 1
    %v883 = vmax.f32 %v881, %v882
    %v884 = vmul.f32 %v848, %v866
    %v885 = vmul.f32 %v848, %v867
    %vm886 = vcmask 57344
    %v887 = vsel %vm886, %v884, 0.0
    %888 = vadd.xlane.f32.xlu0 %v887
    %v889 = vpop.xlane.xlu0 %888
    %v890 = vsel %vm886, %v885, 0.0
    %891 = vadd.xlane.f32.xlu0 %v890
    %v892 = vpop.xlane.xlu0 %891
    %v893 = vmax.f32 %v889, 0.0
    %v894 = vmax.f32 %v892, 0.0
    %v895 = vmul.f32 %v849, %v893
    %v896 = vmul.f32 %v849, %v894
    %v897 = vadd.f32 %v895, 0.0
    %v898 = vadd.f32 %v896, 0.0
    %v899 = vmul.f32 %v848, %v876
    %v900 = vmul.f32 %v848, %v883
    %v901 = vsel %vm886, %v899, 0.0
    %902 = vadd.xlane.f32.xlu0 %v901
    %v903 = vpop.xlane.xlu0 %902
    %v904 = vsel %vm886, %v900, 0.0
    %905 = vadd.xlane.f32.xlu0 %v904
    %v906 = vpop.xlane.xlu0 %905
    %v907 = vmax.f32 %v903, 0.0
    %v908 = vmax.f32 %v906, 0.0
    %v909 = vmul.f32 %v849, %v907
    %v910 = vmul.f32 %v849, %v908
    %v911 = vadd.f32 %v909, 0.0
    %v912 = vadd.f32 %v910, 0.0
    %v913 = vadd.f32 %v897, %v911
    %v914 = vadd.f32 %v898, %v912
    %v915 = vxor.u32 %v913, 2147483648
    %v916 = vxor.u32 %v914, 2147483648
    %v917 = vmul.f32 %v915, 1.442695
    %v918 = vpow.pop %v917
    %v919 = vmul.f32 %v916, 1.442695
    %v920 = vpow.pop %v919
    %v921 = vadd.f32 %v918, 1.0
    %v922 = vadd.f32 %v920, 1.0
    %v923 = vrcp.pop %v921
    %v924 = vmul.f32 1.0, %v923
    %v925 = vrcp.pop %v922
    %v926 = vmul.f32 1.0, %v925
    %v927 = vlaneseq
    %v928 = vshrl.u32 %v927, 7
    %vm929 = vcmp.eq.s32.totalorder %v928, %v582
    %v930 = vsel %vm929, 1, 0
    %v931 = vcvt.s32.f32 %v930
    %v934 = vlaneseq
    %v935 = vshrl.u32 %v934, 7
    %v936 = vsub.s32 0, %v935
    %v937 = vrot.slane %v924, %v936
    %v938 = vlaneseq
    %v939 = vshrl.u32 %v938, 7
    %v940 = vsub.s32 0, %v939
    %v941 = vrot.slane %v926, %v940
    %v944 = vmul.f32 %v931, %v937
    %v945 = vmul.f32 %v931, %v941
    %v946 = vsel %vm670, %v944, 0.0
    %947 = vadd.xlane.f32.xlu0 %v946
    %v948 = vpop.xlane.xlu0 %947
    %v949 = vsel %vm670, %v945, 0.0
    %950 = vadd.xlane.f32.xlu0 %v949
    %v951 = vpop.xlane.xlu0 %950
    %v952 = vmul.f32 %v845, %v948
    %v953 = vmul.f32 %v847, %v951
    %v986 = vsel %vm647, %v196, %v184
    %v987 = vsel %vm649, %v208, %v986
    %v988 = vsel %vm651, %v220, %v987
    %v989 = vsel %vm653, %v232, %v988
    %v990 = vsel %vm655, %v244, %v989
    %v991 = vsel %vm657, %v256, %v990
    %v992 = vsel %vm659, %v268, %v991
    %v993 = vsel %vm647, %v202, %v190
    %v994 = vsel %vm649, %v214, %v993
    %v995 = vsel %vm651, %v226, %v994
    %v996 = vsel %vm653, %v238, %v995
    %v997 = vsel %vm655, %v250, %v996
    %v998 = vsel %vm657, %v262, %v997
    %v999 = vsel %vm659, %v274, %v998
    %v1000 = vsel %vm647, %v292, %v280
    %v1001 = vsel %vm649, %v304, %v1000
    %v1002 = vsel %vm651, %v316, %v1001
    %v1003 = vsel %vm653, %v328, %v1002
    %v1004 = vsel %vm655, %v340, %v1003
    %v1005 = vsel %vm657, %v352, %v1004
    %v1006 = vsel %vm659, %v364, %v1005
    %v1007 = vsel %vm647, %v298, %v286
    %v1008 = vsel %vm649, %v310, %v1007
    %v1009 = vsel %vm651, %v322, %v1008
    %v1010 = vsel %vm653, %v334, %v1009
    %v1011 = vsel %vm655, %v346, %v1010
    %v1012 = vsel %vm657, %v358, %v1011
    %v1013 = vsel %vm659, %v370, %v1012
    %v1018 = vmul.f32 %v952, %v992
    %v1019 = vmul.f32 %v952, %v999
    %v1020 = vmul.f32 %v953, %v1006
    %v1021 = vmul.f32 %v953, %v1013
    %v1022 = vrot.slane %v1018, 4
    %v1023 = vadd.f32 %v1018, %v1022
    %v1024 = vrot.slane %v1023, 2
    %v1025 = vadd.f32 %v1023, %v1024
    %v1026 = vrot.slane %v1025, 1
    %v1027 = vadd.f32 %v1025, %v1026
    %v1028 = vrot.slane %v1019, 4
    %v1029 = vadd.f32 %v1019, %v1028
    %v1030 = vrot.slane %v1029, 2
    %v1031 = vadd.f32 %v1029, %v1030
    %v1032 = vrot.slane %v1031, 1
    %v1033 = vadd.f32 %v1031, %v1032
    %v1034 = vrot.slane %v1020, 4
    %v1035 = vadd.f32 %v1020, %v1034
    %v1036 = vrot.slane %v1035, 2
    %v1037 = vadd.f32 %v1035, %v1036
    %v1038 = vrot.slane %v1037, 1
    %v1039 = vadd.f32 %v1037, %v1038
    %v1040 = vrot.slane %v1021, 4
    %v1041 = vadd.f32 %v1021, %v1040
    %v1042 = vrot.slane %v1041, 2
    %v1043 = vadd.f32 %v1041, %v1042
    %v1044 = vrot.slane %v1043, 1
    %v1045 = vadd.f32 %v1043, %v1044
    %v1046 = vmul.f32 %v1027, 0.015625
    %v1047 = vmul.f32 %v1033, 0.015625
    %v1048 = vmul.f32 %v1039, 0.015625
    %v1049 = vmul.f32 %v1045, 0.015625
    %v1082 = vsel %vm647, %v388, %v376
    %v1083 = vsel %vm649, %v400, %v1082
    %v1084 = vsel %vm651, %v412, %v1083
    %v1085 = vsel %vm653, %v424, %v1084
    %v1086 = vsel %vm655, %v436, %v1085
    %v1087 = vsel %vm657, %v448, %v1086
    %v1088 = vsel %vm659, %v460, %v1087
    %v1089 = vsel %vm647, %v394, %v382
    %v1090 = vsel %vm649, %v406, %v1089
    %v1091 = vsel %vm651, %v418, %v1090
    %v1092 = vsel %vm653, %v430, %v1091
    %v1093 = vsel %vm655, %v442, %v1092
    %v1094 = vsel %vm657, %v454, %v1093
    %v1095 = vsel %vm659, %v466, %v1094
    %v1096 = vsel %vm647, %v484, %v472
    %v1097 = vsel %vm649, %v496, %v1096
    %v1098 = vsel %vm651, %v508, %v1097
    %v1099 = vsel %vm653, %v520, %v1098
    %v1100 = vsel %vm655, %v532, %v1099
    %v1101 = vsel %vm657, %v544, %v1100
    %v1102 = vsel %vm659, %v556, %v1101
    %v1103 = vsel %vm647, %v490, %v478
    %v1104 = vsel %vm649, %v502, %v1103
    %v1105 = vsel %vm651, %v514, %v1104
    %v1106 = vsel %vm653, %v526, %v1105
    %v1107 = vsel %vm655, %v538, %v1106
    %v1108 = vsel %vm657, %v550, %v1107
    %v1109 = vsel %vm659, %v562, %v1108
    %v1114 = vmul.f32 %v952, %v1088
    %v1115 = vmul.f32 %v952, %v1095
    %v1116 = vmul.f32 %v953, %v1102
    %v1117 = vmul.f32 %v953, %v1109
    %v1118 = vrot.slane %v1114, 4
    %v1119 = vmax.f32 %v1114, %v1118
    %v1120 = vrot.slane %v1119, 2
    %v1121 = vmax.f32 %v1119, %v1120
    %v1122 = vrot.slane %v1121, 1
    %v1123 = vmax.f32 %v1121, %v1122
    %v1124 = vrot.slane %v1115, 4
    %v1125 = vmax.f32 %v1115, %v1124
    %v1126 = vrot.slane %v1125, 2
    %v1127 = vmax.f32 %v1125, %v1126
    %v1128 = vrot.slane %v1127, 1
    %v1129 = vmax.f32 %v1127, %v1128
    %v1130 = vrot.slane %v1116, 4
    %v1131 = vmax.f32 %v1116, %v1130
    %v1132 = vrot.slane %v1131, 2
    %v1133 = vmax.f32 %v1131, %v1132
    %v1134 = vrot.slane %v1133, 1
    %v1135 = vmax.f32 %v1133, %v1134
    %v1136 = vrot.slane %v1117, 4
    %v1137 = vmax.f32 %v1117, %v1136
    %v1138 = vrot.slane %v1137, 2
    %v1139 = vmax.f32 %v1137, %v1138
    %v1140 = vrot.slane %v1139, 1
    %v1141 = vmax.f32 %v1139, %v1140
    %vm1142 = vcmask 1041408
    %vm1143 = vcmask 1043458
    %vm1144 = vmor %vm1143, %vm1142
    %vm1145 = vcmask 275460
    %vm1146 = vmor %vm1145, %vm1144
    %1147 = vst.msk [vmem:[#allocation2] sm:$0x3f] %vm1146, 0.0
    %1148 = vst.msk [vmem:[#allocation2 + $0x6] sm:$0x3f] %vm1146, 0.0
    %v1153 = vcombine.low %v1046, %v1047
    %v1155 = vunpack.c.l.s4 1966171168
    %v1156 = vunpack.c.0.s8 %v1155
    %v1157 = vlaneseq
    %v1158 = vshrl.u32 %v1157, 7
    %v1159 = vsub.s32 %v1156, %v1158
    %v1160 = vrot.slane %v1153, %v1159
    %v1162 = vunpack.c.l.s4 1966171168
    %v1163 = vunpack.c.0.s8 %v1162
    %v1164 = vlaneseq
    %v1165 = vshrl.u32 %v1164, 7
    %v1166 = vsub.s32 %v1163, %v1165
    %v1167 = vrot.slane %v1160, %v1166
    %v1168 = vcombine.low %v1048, %v1049
    %v1170 = vunpack.c.l.s4 1966171168
    %v1171 = vunpack.c.0.s8 %v1170
    %v1172 = vlaneseq
    %v1173 = vshrl.u32 %v1172, 7
    %v1174 = vsub.s32 %v1171, %v1173
    %v1175 = vrot.slane %v1168, %v1174
    %v1177 = vunpack.c.l.s4 1966171168
    %v1178 = vunpack.c.0.s8 %v1177
    %v1179 = vlaneseq
    %v1180 = vshrl.u32 %v1179, 7
    %v1181 = vsub.s32 %v1178, %v1180
    %v1182 = vrot.slane %v1175, %v1181
    %1183 = vrot.lane.b32.xlu0 %v1167, 17
    %v1184 = vpop.permute.xlu0 %1183
    %1185 = vrot.lane.b32.xlu0 %v1182, 17
    %v1186 = vpop.permute.xlu0 %1185
    %v1187 = vrot.slane %v1184, 7
    %v1188 = vrot.slane %v1186, 7
    %vm1189 = vcmask 138240
    %v1190 = vsel %vm1189, %v1187, %v1184
    %v1191 = vsel %vm1189, %v1188, %v1186
    %v1194 = vlaneseq
    %vm1195 = vcmp.ge.s32.totalorder %v1194, 17
    %vm1196 = vcmp.lt.s32.totalorder %v1194, 273
    %vm1197 = vmand %vm1195, %vm1196
    %1198 = vst.msk [vmem:[#allocation2] ss:$2 sm:$0x7] %vm1197, %v1190
    %s1199 = scalar_lea.vmem [#allocation2], 6
    %1200 = vst.msk [vmem:[%s1199] ss:$2 sm:$0x7] %vm1197, %v1191
    %v1205 = vcombine.low %v1123, %v1129
    %v1207 = vunpack.c.l.s4 1966171168
    %v1208 = vunpack.c.0.s8 %v1207
    %v1209 = vlaneseq
    %v1210 = vshrl.u32 %v1209, 7
    %v1211 = vsub.s32 %v1208, %v1210
    %v1212 = vrot.slane %v1205, %v1211
    %v1214 = vunpack.c.l.s4 1966171168
    %v1215 = vunpack.c.0.s8 %v1214
    %v1216 = vlaneseq
    %v1217 = vshrl.u32 %v1216, 7
    %v1218 = vsub.s32 %v1215, %v1217
    %v1219 = vrot.slane %v1212, %v1218
    %v1220 = vcombine.low %v1135, %v1141
    %v1222 = vunpack.c.l.s4 1966171168
    %v1223 = vunpack.c.0.s8 %v1222
    %v1224 = vlaneseq
    %v1225 = vshrl.u32 %v1224, 7
    %v1226 = vsub.s32 %v1223, %v1225
    %v1227 = vrot.slane %v1220, %v1226
    %v1229 = vunpack.c.l.s4 1966171168
    %v1230 = vunpack.c.0.s8 %v1229
    %v1231 = vlaneseq
    %v1232 = vshrl.u32 %v1231, 7
    %v1233 = vsub.s32 %v1230, %v1232
    %v1234 = vrot.slane %v1227, %v1233
    %1235 = vrot.lane.b32.xlu0 %v1219, 17
    %v1236 = vpop.permute.xlu0 %1235
    %1237 = vrot.lane.b32.xlu0 %v1234, 17
    %v1238 = vpop.permute.xlu0 %1237
    %v1239 = vrot.slane %v1236, 7
    %v1240 = vrot.slane %v1238, 7
    %v1241 = vsel %vm1189, %v1239, %v1236
    %v1242 = vsel %vm1189, %v1240, %v1238
    %s1245 = scalar_lea.vmem [#allocation2], 1
    %1246 = vst.msk [vmem:[%s1245] ss:$2 sm:$0x7] %vm1197, %v1241
    %s1247 = scalar_lea.vmem [#allocation2], 7
    %1248 = vst.msk [vmem:[%s1247] ss:$2 sm:$0x7] %vm1197, %v1242
    %v1249 = vadd.s32 %v582, 128
    %vm1250 = vcmp.lt.s32.totalorder %v582, 0
    %v1251 = vsub.s32 0, %v582
    %v1252 = vsel %vm1250, %v1251, %v582
    %v1253 = vshrl.u32 %v1252, 4
    %v1254 = vand.u32 %v1252, 15
    %v1255 = vsub.s32 0, %v1254
    %v1256 = vsel %vm1250, %v1255, %v1254
    %vm1257 = vcmp.lt.s32.totalorder %v1249, 0
    %v1258 = vsub.s32 0, %v1249
    %v1259 = vsel %vm1257, %v1258, %v1249
    %v1260 = vshrl.u32 %v1259, 4
    %v1261 = vand.u32 %v1259, 15
    %v1262 = vsub.s32 0, %v1261
    %v1263 = vsel %vm1257, %v1262, %v1261
    %vm1264 = vcmp.ne.s32.totalorder %v1256, 0
    %vm1265 = vcmp.ne.s32.totalorder %v1263, 0
    %vm1266 = vcmp.lt.s32.totalorder %v1256, 0
    %vm1267 = vcmp.lt.s32.totalorder %v1263, 0
    %vm1268 = vmand %vm1266, %vm1264
    %vm1269 = vmand %vm1267, %vm1265
    %v1270 = vadd.s32 %v1256, 16
    %v1271 = vadd.s32 %v1263, 16
    %v1272 = vsel %vm1268, %v1270, %v1256
    %v1273 = vsel %vm1269, %v1271, %v1263
    %v1274 = vld [vmem:[#allocation2] sm:$0xf]
    %v1275 = vld [vmem:[#allocation2 + $0x6] sm:$0xf]
    %s1276 = sld [smem:[#allocation7]]
    %s1277 = sld [smem:[#allocation7 + $0x9]]
    %v1278 = vstv %s1276
    %v1279 = vmul.f32 %v1278, %v1274
    %v1280 = vmul.f32 %v1278, %v1275
    %v1281 = vstv %s1277
    %v1282 = vmul.f32 %v1281, %v1274
    %v1283 = vmul.f32 %v1281, %v1275
    %v1286 = vrot.slane %v1282, 7
    %v1287 = vrot.slane %v1286, 2
    %v1288 = vrot.slane %v1283, 7
    %v1289 = vrot.slane %v1288, 2
    %v1292 = vadd.f32 %v1279, %v1287
    %v1293 = vadd.f32 %v1280, %v1289
    %v1294 = vadd.s32 %v1272, 4294967295
    %v1295 = vadd.s32 %v1273, 4294967295
    %vm1296 = vcmp.ge.s32.totalorder %v1294, 0
    %vm1297 = vcmp.ge.s32.totalorder %v1295, 0
    %vm1298 = vcmp.lt.s32.totalorder %v1294, 16
    %vm1299 = vcmp.lt.s32.totalorder %v1295, 16
    %vm1300 = vmand %vm1296, %vm1298
    %vm1301 = vmand %vm1297, %vm1299
    %v1302 = vsel %vm1300, 1, 0
    %v1303 = vsel %vm1301, 1, 0
    %vm1304 = vcmp.eq.s32.totalorder %v1302, 1
    %vm1305 = vcmp.eq.s32.totalorder %v1303, 1
    %v1308 = vlaneseq
    %v1309 = vshrl.u32 %v1308, 7
    %v1310 = vsub.s32 0, %v1309
    %v1311 = vrot.slane %v1292, %v1310
    %v1312 = vlaneseq
    %v1313 = vshrl.u32 %v1312, 7
    %v1314 = vsub.s32 2, %v1313
    %v1315 = vrot.slane %v1292, %v1314
    %v1316 = vlaneseq
    %v1317 = vshrl.u32 %v1316, 7
    %v1318 = vsub.s32 0, %v1317
    %v1319 = vrot.slane %v1293, %v1318
    %v1320 = vlaneseq
    %v1321 = vshrl.u32 %v1320, 7
    %v1322 = vsub.s32 2, %v1321
    %v1323 = vrot.slane %v1293, %v1322
    %v1328 = vsel %vm1304, %v1311, 0.0
    %v1329 = vsel %vm1305, %v1315, 0.0
    %v1330 = vsel %vm1304, %v1319, 0.0
    %v1331 = vsel %vm1305, %v1323, 0.0
    %v1332 = vadd.f32 %v1328, 0.0
    %v1333 = vadd.f32 %v1329, 0.0
    %v1334 = vadd.f32 %v1330, 0.0
    %v1335 = vadd.f32 %v1331, 0.0
    %v1336 = vld [vmem:[#allocation2] sm:$0x3f]
    %v1337 = vld [vmem:[#allocation2 + $0x6] sm:$0x3f]
    %s1338 = sld [smem:[#allocation7 + $0x1]]
    %s1339 = sld [smem:[#allocation7 + $0xa]]
    %v1340 = vstv %s1338
    %v1341 = vmul.f32 %v1340, %v1336
    %v1342 = vmul.f32 %v1340, %v1337
    %v1343 = vstv %s1339
    %v1344 = vmul.f32 %v1343, %v1336
    %v1345 = vmul.f32 %v1343, %v1337
    %v1348 = vrot.slane %v1344, 7
    %v1349 = vrot.slane %v1348, 2
    %v1350 = vrot.slane %v1345, 7
    %v1351 = vrot.slane %v1350, 2
    %v1354 = vadd.f32 %v1341, %v1349
    %v1355 = vadd.f32 %v1342, %v1351
    %v1358 = vlaneseq
    %v1359 = vshrl.u32 %v1358, 7
    %v1360 = vsub.s32 0, %v1359
    %v1361 = vrot.slane %v1354, %v1360
    %v1362 = vlaneseq
    %v1363 = vshrl.u32 %v1362, 7
    %v1364 = vsub.s32 2, %v1363
    %v1365 = vrot.slane %v1354, %v1364
    %v1366 = vlaneseq
    %v1367 = vshrl.u32 %v1366, 7
    %v1368 = vsub.s32 4, %v1367
    %v1369 = vrot.slane %v1354, %v1368
    %v1370 = vlaneseq
    %v1371 = vshrl.u32 %v1370, 7
    %v1372 = vsub.s32 0, %v1371
    %v1373 = vrot.slane %v1355, %v1372
    %v1374 = vlaneseq
    %v1375 = vshrl.u32 %v1374, 7
    %v1376 = vsub.s32 2, %v1375
    %v1377 = vrot.slane %v1355, %v1376
    %v1378 = vlaneseq
    %v1379 = vshrl.u32 %v1378, 7
    %v1380 = vsub.s32 4, %v1379
    %v1381 = vrot.slane %v1355, %v1380
    %1382 = vrot.lane.b32.xlu0 %v1361, 127
    %v1383 = vpop.permute.xlu0 %1382
    %1384 = vrot.lane.b32.xlu0 %v1365, 127
    %v1385 = vpop.permute.xlu0 %1384
    %1386 = vrot.lane.b32.xlu0 %v1369, 127
    %v1387 = vpop.permute.xlu0 %1386
    %1388 = vrot.lane.b32.xlu0 %v1373, 127
    %v1389 = vpop.permute.xlu0 %1388
    %1390 = vrot.lane.b32.xlu0 %v1377, 127
    %v1391 = vpop.permute.xlu0 %1390
    %1392 = vrot.lane.b32.xlu0 %v1381, 127
    %v1393 = vpop.permute.xlu0 %1392
    %vm1394 = vcmask 1039360
    %v1395 = vsel %vm1394, %v1383, %v1385
    %v1396 = vsel %vm1394, %v1385, %v1387
    %v1397 = vsel %vm1394, %v1389, %v1391
    %v1398 = vsel %vm1394, %v1391, %v1393
    %v1403 = vadd.f32 %v1332, %v1395
    %v1404 = vadd.f32 %v1333, %v1396
    %v1405 = vadd.f32 %v1334, %v1397
    %v1406 = vadd.f32 %v1335, %v1398
    %s1407 = sld [smem:[#allocation7 + $0x2]]
    %s1408 = sld [smem:[#allocation7 + $0xb]]
    %v1409 = vstv %s1407
    %v1410 = vmul.f32 %v1409, %v1336
    %v1411 = vmul.f32 %v1409, %v1337
    %v1412 = vstv %s1408
    %v1413 = vmul.f32 %v1412, %v1336
    %v1414 = vmul.f32 %v1412, %v1337
    %v1417 = vrot.slane %v1413, 7
    %v1418 = vrot.slane %v1417, 2
    %v1419 = vrot.slane %v1414, 7
    %v1420 = vrot.slane %v1419, 2
    %v1423 = vadd.f32 %v1410, %v1418
    %v1424 = vadd.f32 %v1411, %v1420
    %v1425 = vadd.s32 %v1272, 1
    %v1426 = vadd.s32 %v1273, 1
    %vm1427 = vcmp.ge.s32.totalorder %v1425, 0
    %vm1428 = vcmp.ge.s32.totalorder %v1426, 0
    %vm1429 = vcmp.lt.s32.totalorder %v1425, 16
    %vm1430 = vcmp.lt.s32.totalorder %v1426, 16
    %vm1431 = vmand %vm1427, %vm1429
    %vm1432 = vmand %vm1428, %vm1430
    %v1433 = vsel %vm1431, 1, 0
    %v1434 = vsel %vm1432, 1, 0
    %vm1435 = vcmp.eq.s32.totalorder %v1433, 1
    %vm1436 = vcmp.eq.s32.totalorder %v1434, 1
    %v1439 = vlaneseq
    %v1440 = vshrl.u32 %v1439, 7
    %v1441 = vsub.s32 0, %v1440
    %v1442 = vrot.slane %v1423, %v1441
    %v1443 = vlaneseq
    %v1444 = vshrl.u32 %v1443, 7
    %v1445 = vsub.s32 2, %v1444
    %v1446 = vrot.slane %v1423, %v1445
    %v1447 = vlaneseq
    %v1448 = vshrl.u32 %v1447, 7
    %v1449 = vsub.s32 4, %v1448
    %v1450 = vrot.slane %v1423, %v1449
    %v1451 = vlaneseq
    %v1452 = vshrl.u32 %v1451, 7
    %v1453 = vsub.s32 0, %v1452
    %v1454 = vrot.slane %v1424, %v1453
    %v1455 = vlaneseq
    %v1456 = vshrl.u32 %v1455, 7
    %v1457 = vsub.s32 2, %v1456
    %v1458 = vrot.slane %v1424, %v1457
    %v1459 = vlaneseq
    %v1460 = vshrl.u32 %v1459, 7
    %v1461 = vsub.s32 4, %v1460
    %v1462 = vrot.slane %v1424, %v1461
    %1463 = vrot.lane.b32.xlu0 %v1442, 126
    %v1464 = vpop.permute.xlu0 %1463
    %1465 = vrot.lane.b32.xlu0 %v1446, 126
    %v1466 = vpop.permute.xlu0 %1465
    %1467 = vrot.lane.b32.xlu0 %v1450, 126
    %v1468 = vpop.permute.xlu0 %1467
    %1469 = vrot.lane.b32.xlu0 %v1454, 126
    %v1470 = vpop.permute.xlu0 %1469
    %1471 = vrot.lane.b32.xlu0 %v1458, 126
    %v1472 = vpop.permute.xlu0 %1471
    %1473 = vrot.lane.b32.xlu0 %v1462, 126
    %v1474 = vpop.permute.xlu0 %1473
    %vm1475 = vcmask 1031168
    %v1476 = vsel %vm1475, %v1464, %v1466
    %v1477 = vsel %vm1475, %v1466, %v1468
    %v1478 = vsel %vm1475, %v1470, %v1472
    %v1479 = vsel %vm1475, %v1472, %v1474
    %v1484 = vsel %vm1435, %v1476, 0.0
    %v1485 = vsel %vm1436, %v1477, 0.0
    %v1486 = vsel %vm1435, %v1478, 0.0
    %v1487 = vsel %vm1436, %v1479, 0.0
    %v1488 = vadd.f32 %v1403, %v1484
    %v1489 = vadd.f32 %v1404, %v1485
    %v1490 = vadd.f32 %v1405, %v1486
    %v1491 = vadd.f32 %v1406, %v1487
    %s1492 = sld [smem:[#allocation7 + $0x3]]
    %s1493 = sld [smem:[#allocation7 + $0xc]]
    %v1494 = vstv %s1492
    %v1495 = vmul.f32 %v1494, %v1336
    %v1496 = vmul.f32 %v1494, %v1337
    %v1497 = vstv %s1493
    %v1498 = vmul.f32 %v1497, %v1336
    %v1499 = vmul.f32 %v1497, %v1337
    %v1502 = vrot.slane %v1498, 7
    %v1503 = vrot.slane %v1502, 2
    %v1504 = vrot.slane %v1499, 7
    %v1505 = vrot.slane %v1504, 2
    %v1508 = vadd.f32 %v1495, %v1503
    %v1509 = vadd.f32 %v1496, %v1505
    %v1512 = vlaneseq
    %v1513 = vshrl.u32 %v1512, 7
    %v1514 = vsub.s32 0, %v1513
    %v1515 = vrot.slane %v1508, %v1514
    %v1516 = vlaneseq
    %v1517 = vshrl.u32 %v1516, 7
    %v1518 = vsub.s32 2, %v1517
    %v1519 = vrot.slane %v1508, %v1518
    %v1520 = vlaneseq
    %v1521 = vshrl.u32 %v1520, 7
    %v1522 = vsub.s32 4, %v1521
    %v1523 = vrot.slane %v1508, %v1522
    %v1524 = vlaneseq
    %v1525 = vshrl.u32 %v1524, 7
    %v1526 = vsub.s32 0, %v1525
    %v1527 = vrot.slane %v1509, %v1526
    %v1528 = vlaneseq
    %v1529 = vshrl.u32 %v1528, 7
    %v1530 = vsub.s32 2, %v1529
    %v1531 = vrot.slane %v1509, %v1530
    %v1532 = vlaneseq
    %v1533 = vshrl.u32 %v1532, 7
    %v1534 = vsub.s32 4, %v1533
    %v1535 = vrot.slane %v1509, %v1534
    %1536 = vrot.lane.b32.xlu0 %v1515, 112
    %v1537 = vpop.permute.xlu0 %1536
    %1538 = vrot.lane.b32.xlu0 %v1519, 112
    %v1539 = vpop.permute.xlu0 %1538
    %1540 = vrot.lane.b32.xlu0 %v1523, 112
    %v1541 = vpop.permute.xlu0 %1540
    %1542 = vrot.lane.b32.xlu0 %v1527, 112
    %v1543 = vpop.permute.xlu0 %1542
    %1544 = vrot.lane.b32.xlu0 %v1531, 112
    %v1545 = vpop.permute.xlu0 %1544
    %1546 = vrot.lane.b32.xlu0 %v1535, 112
    %v1547 = vpop.permute.xlu0 %1546
    %vm1548 = vcmask 916480
    %v1549 = vsel %vm1548, %v1537, %v1539
    %v1550 = vsel %vm1548, %v1539, %v1541
    %v1551 = vsel %vm1548, %v1543, %v1545
    %v1552 = vsel %vm1548, %v1545, %v1547
    %v1557 = vsel %vm1304, %v1549, 0.0
    %v1558 = vsel %vm1305, %v1550, 0.0
    %v1559 = vsel %vm1304, %v1551, 0.0
    %v1560 = vsel %vm1305, %v1552, 0.0
    %v1561 = vadd.f32 %v1488, %v1557
    %v1562 = vadd.f32 %v1489, %v1558
    %v1563 = vadd.f32 %v1490, %v1559
    %v1564 = vadd.f32 %v1491, %v1560
    %s1565 = sld [smem:[#allocation7 + $0x4]]
    %s1566 = sld [smem:[#allocation7 + $0xd]]
    %v1567 = vstv %s1565
    %v1568 = vmul.f32 %v1567, %v1336
    %v1569 = vmul.f32 %v1567, %v1337
    %v1570 = vstv %s1566
    %v1571 = vmul.f32 %v1570, %v1336
    %v1572 = vmul.f32 %v1570, %v1337
    %v1575 = vrot.slane %v1571, 7
    %v1576 = vrot.slane %v1575, 2
    %v1577 = vrot.slane %v1572, 7
    %v1578 = vrot.slane %v1577, 2
    %v1581 = vadd.f32 %v1568, %v1576
    %v1582 = vadd.f32 %v1569, %v1578
    %v1585 = vlaneseq
    %v1586 = vshrl.u32 %v1585, 7
    %v1587 = vsub.s32 0, %v1586
    %v1588 = vrot.slane %v1581, %v1587
    %v1589 = vlaneseq
    %v1590 = vshrl.u32 %v1589, 7
    %v1591 = vsub.s32 2, %v1590
    %v1592 = vrot.slane %v1581, %v1591
    %v1593 = vlaneseq
    %v1594 = vshrl.u32 %v1593, 7
    %v1595 = vsub.s32 4, %v1594
    %v1596 = vrot.slane %v1581, %v1595
    %v1597 = vlaneseq
    %v1598 = vshrl.u32 %v1597, 7
    %v1599 = vsub.s32 0, %v1598
    %v1600 = vrot.slane %v1582, %v1599
    %v1601 = vlaneseq
    %v1602 = vshrl.u32 %v1601, 7
    %v1603 = vsub.s32 2, %v1602
    %v1604 = vrot.slane %v1582, %v1603
    %v1605 = vlaneseq
    %v1606 = vshrl.u32 %v1605, 7
    %v1607 = vsub.s32 4, %v1606
    %v1608 = vrot.slane %v1582, %v1607
    %1609 = vrot.lane.b32.xlu0 %v1588, 111
    %v1610 = vpop.permute.xlu0 %1609
    %1611 = vrot.lane.b32.xlu0 %v1592, 111
    %v1612 = vpop.permute.xlu0 %1611
    %1613 = vrot.lane.b32.xlu0 %v1596, 111
    %v1614 = vpop.permute.xlu0 %1613
    %1615 = vrot.lane.b32.xlu0 %v1600, 111
    %v1616 = vpop.permute.xlu0 %1615
    %1617 = vrot.lane.b32.xlu0 %v1604, 111
    %v1618 = vpop.permute.xlu0 %1617
    %1619 = vrot.lane.b32.xlu0 %v1608, 111
    %v1620 = vpop.permute.xlu0 %1619
    %vm1621 = vcmask 908288
    %v1622 = vsel %vm1621, %v1610, %v1612
    %v1623 = vsel %vm1621, %v1612, %v1614
    %v1624 = vsel %vm1621, %v1616, %v1618
    %v1625 = vsel %vm1621, %v1618, %v1620
    %v1630 = vadd.f32 %v1561, %v1622
    %v1631 = vadd.f32 %v1562, %v1623
    %v1632 = vadd.f32 %v1563, %v1624
    %v1633 = vadd.f32 %v1564, %v1625
    %s1634 = sld [smem:[#allocation7 + $0x5]]
    %s1635 = sld [smem:[#allocation7 + $0xe]]
    %v1636 = vstv %s1634
    %v1637 = vmul.f32 %v1636, %v1336
    %v1638 = vmul.f32 %v1636, %v1337
    %v1639 = vstv %s1635
    %v1640 = vmul.f32 %v1639, %v1336
    %v1641 = vmul.f32 %v1639, %v1337
    %v1644 = vrot.slane %v1640, 7
    %v1645 = vrot.slane %v1644, 2
    %v1646 = vrot.slane %v1641, 7
    %v1647 = vrot.slane %v1646, 2
    %v1650 = vadd.f32 %v1637, %v1645
    %v1651 = vadd.f32 %v1638, %v1647
    %v1654 = vlaneseq
    %v1655 = vshrl.u32 %v1654, 7
    %v1656 = vsub.s32 0, %v1655
    %v1657 = vrot.slane %v1650, %v1656
    %v1658 = vlaneseq
    %v1659 = vshrl.u32 %v1658, 7
    %v1660 = vsub.s32 2, %v1659
    %v1661 = vrot.slane %v1650, %v1660
    %v1662 = vlaneseq
    %v1663 = vshrl.u32 %v1662, 7
    %v1664 = vsub.s32 4, %v1663
    %v1665 = vrot.slane %v1650, %v1664
    %v1666 = vlaneseq
    %v1667 = vshrl.u32 %v1666, 7
    %v1668 = vsub.s32 0, %v1667
    %v1669 = vrot.slane %v1651, %v1668
    %v1670 = vlaneseq
    %v1671 = vshrl.u32 %v1670, 7
    %v1672 = vsub.s32 2, %v1671
    %v1673 = vrot.slane %v1651, %v1672
    %v1674 = vlaneseq
    %v1675 = vshrl.u32 %v1674, 7
    %v1676 = vsub.s32 4, %v1675
    %v1677 = vrot.slane %v1651, %v1676
    %1678 = vrot.lane.b32.xlu0 %v1657, 110
    %v1679 = vpop.permute.xlu0 %1678
    %1680 = vrot.lane.b32.xlu0 %v1661, 110
    %v1681 = vpop.permute.xlu0 %1680
    %1682 = vrot.lane.b32.xlu0 %v1665, 110
    %v1683 = vpop.permute.xlu0 %1682
    %1684 = vrot.lane.b32.xlu0 %v1669, 110
    %v1685 = vpop.permute.xlu0 %1684
    %1686 = vrot.lane.b32.xlu0 %v1673, 110
    %v1687 = vpop.permute.xlu0 %1686
    %1688 = vrot.lane.b32.xlu0 %v1677, 110
    %v1689 = vpop.permute.xlu0 %1688
    %vm1690 = vcmask 900096
    %v1691 = vsel %vm1690, %v1679, %v1681
    %v1692 = vsel %vm1690, %v1681, %v1683
    %v1693 = vsel %vm1690, %v1685, %v1687
    %v1694 = vsel %vm1690, %v1687, %v1689
    %v1699 = vsel %vm1435, %v1691, 0.0
    %v1700 = vsel %vm1436, %v1692, 0.0
    %v1701 = vsel %vm1435, %v1693, 0.0
    %v1702 = vsel %vm1436, %v1694, 0.0
    %v1703 = vadd.f32 %v1630, %v1699
    %v1704 = vadd.f32 %v1631, %v1700
    %v1705 = vadd.f32 %v1632, %v1701
    %v1706 = vadd.f32 %v1633, %v1702
    %s1707 = sld [smem:[#allocation7 + $0x6]]
    %s1708 = sld [smem:[#allocation7 + $0xf]]
    %v1709 = vstv %s1707
    %v1710 = vmul.f32 %v1709, %v1336
    %v1711 = vmul.f32 %v1709, %v1337
    %v1712 = vstv %s1708
    %v1713 = vmul.f32 %v1712, %v1336
    %v1714 = vmul.f32 %v1712, %v1337
    %v1717 = vrot.slane %v1713, 7
    %v1718 = vrot.slane %v1717, 2
    %v1719 = vrot.slane %v1714, 7
    %v1720 = vrot.slane %v1719, 2
    %v1723 = vadd.f32 %v1710, %v1718
    %v1724 = vadd.f32 %v1711, %v1720
    %v1727 = vlaneseq
    %v1728 = vshrl.u32 %v1727, 7
    %v1729 = vsub.s32 0, %v1728
    %v1730 = vrot.slane %v1723, %v1729
    %v1731 = vlaneseq
    %v1732 = vshrl.u32 %v1731, 7
    %v1733 = vsub.s32 2, %v1732
    %v1734 = vrot.slane %v1723, %v1733
    %v1735 = vlaneseq
    %v1736 = vshrl.u32 %v1735, 7
    %v1737 = vsub.s32 4, %v1736
    %v1738 = vrot.slane %v1723, %v1737
    %v1739 = vlaneseq
    %v1740 = vshrl.u32 %v1739, 7
    %v1741 = vsub.s32 0, %v1740
    %v1742 = vrot.slane %v1724, %v1741
    %v1743 = vlaneseq
    %v1744 = vshrl.u32 %v1743, 7
    %v1745 = vsub.s32 2, %v1744
    %v1746 = vrot.slane %v1724, %v1745
    %v1747 = vlaneseq
    %v1748 = vshrl.u32 %v1747, 7
    %v1749 = vsub.s32 4, %v1748
    %v1750 = vrot.slane %v1724, %v1749
    %1751 = vrot.lane.b32.xlu0 %v1730, 96
    %v1752 = vpop.permute.xlu0 %1751
    %1753 = vrot.lane.b32.xlu0 %v1734, 96
    %v1754 = vpop.permute.xlu0 %1753
    %1755 = vrot.lane.b32.xlu0 %v1738, 96
    %v1756 = vpop.permute.xlu0 %1755
    %1757 = vrot.lane.b32.xlu0 %v1742, 96
    %v1758 = vpop.permute.xlu0 %1757
    %1759 = vrot.lane.b32.xlu0 %v1746, 96
    %v1760 = vpop.permute.xlu0 %1759
    %1761 = vrot.lane.b32.xlu0 %v1750, 96
    %v1762 = vpop.permute.xlu0 %1761
    %vm1763 = vcmask 785408
    %v1764 = vsel %vm1763, %v1752, %v1754
    %v1765 = vsel %vm1763, %v1754, %v1756
    %v1766 = vsel %vm1763, %v1758, %v1760
    %v1767 = vsel %vm1763, %v1760, %v1762
    %v1772 = vsel %vm1304, %v1764, 0.0
    %v1773 = vsel %vm1305, %v1765, 0.0
    %v1774 = vsel %vm1304, %v1766, 0.0
    %v1775 = vsel %vm1305, %v1767, 0.0
    %v1776 = vadd.f32 %v1703, %v1772
    %v1777 = vadd.f32 %v1704, %v1773
    %v1778 = vadd.f32 %v1705, %v1774
    %v1779 = vadd.f32 %v1706, %v1775
    %s1780 = sld [smem:[#allocation7 + $0x7]]
    %s1781 = sld [smem:[#allocation7 + $0x10]]
    %v1782 = vstv %s1780
    %v1783 = vmul.f32 %v1782, %v1336
    %v1784 = vmul.f32 %v1782, %v1337
    %v1785 = vstv %s1781
    %v1786 = vmul.f32 %v1785, %v1336
    %v1787 = vmul.f32 %v1785, %v1337
    %v1790 = vrot.slane %v1786, 7
    %v1791 = vrot.slane %v1790, 2
    %v1792 = vrot.slane %v1787, 7
    %v1793 = vrot.slane %v1792, 2
    %v1796 = vadd.f32 %v1783, %v1791
    %v1797 = vadd.f32 %v1784, %v1793
    %v1800 = vlaneseq
    %v1801 = vshrl.u32 %v1800, 7
    %v1802 = vsub.s32 0, %v1801
    %v1803 = vrot.slane %v1796, %v1802
    %v1804 = vlaneseq
    %v1805 = vshrl.u32 %v1804, 7
    %v1806 = vsub.s32 2, %v1805
    %v1807 = vrot.slane %v1796, %v1806
    %v1808 = vlaneseq
    %v1809 = vshrl.u32 %v1808, 7
    %v1810 = vsub.s32 4, %v1809
    %v1811 = vrot.slane %v1796, %v1810
    %v1812 = vlaneseq
    %v1813 = vshrl.u32 %v1812, 7
    %v1814 = vsub.s32 0, %v1813
    %v1815 = vrot.slane %v1797, %v1814
    %v1816 = vlaneseq
    %v1817 = vshrl.u32 %v1816, 7
    %v1818 = vsub.s32 2, %v1817
    %v1819 = vrot.slane %v1797, %v1818
    %v1820 = vlaneseq
    %v1821 = vshrl.u32 %v1820, 7
    %v1822 = vsub.s32 4, %v1821
    %v1823 = vrot.slane %v1797, %v1822
    %1824 = vrot.lane.b32.xlu0 %v1803, 95
    %v1825 = vpop.permute.xlu0 %1824
    %1826 = vrot.lane.b32.xlu0 %v1807, 95
    %v1827 = vpop.permute.xlu0 %1826
    %1828 = vrot.lane.b32.xlu0 %v1811, 95
    %v1829 = vpop.permute.xlu0 %1828
    %1830 = vrot.lane.b32.xlu0 %v1815, 95
    %v1831 = vpop.permute.xlu0 %1830
    %1832 = vrot.lane.b32.xlu0 %v1819, 95
    %v1833 = vpop.permute.xlu0 %1832
    %1834 = vrot.lane.b32.xlu0 %v1823, 95
    %v1835 = vpop.permute.xlu0 %1834
    %vm1836 = vcmask 777216
    %v1837 = vsel %vm1836, %v1825, %v1827
    %v1838 = vsel %vm1836, %v1827, %v1829
    %v1839 = vsel %vm1836, %v1831, %v1833
    %v1840 = vsel %vm1836, %v1833, %v1835
    %v1845 = vadd.f32 %v1776, %v1837
    %v1846 = vadd.f32 %v1777, %v1838
    %v1847 = vadd.f32 %v1778, %v1839
    %v1848 = vadd.f32 %v1779, %v1840
    %s1849 = sld [smem:[#allocation7 + $0x8]]
    %s1850 = sld [smem:[#allocation7 + $0x11]]
    %v1851 = vstv %s1849
    %v1852 = vmul.f32 %v1851, %v1336
    %v1853 = vmul.f32 %v1851, %v1337
    %v1854 = vstv %s1850
    %v1855 = vmul.f32 %v1854, %v1336
    %v1856 = vmul.f32 %v1854, %v1337
    %v1859 = vrot.slane %v1855, 7
    %v1860 = vrot.slane %v1859, 2
    %v1861 = vrot.slane %v1856, 7
    %v1862 = vrot.slane %v1861, 2
    %v1865 = vadd.f32 %v1852, %v1860
    %v1866 = vadd.f32 %v1853, %v1862
    %v1869 = vlaneseq
    %v1870 = vshrl.u32 %v1869, 7
    %v1871 = vsub.s32 0, %v1870
    %v1872 = vrot.slane %v1865, %v1871
    %v1873 = vlaneseq
    %v1874 = vshrl.u32 %v1873, 7
    %v1875 = vsub.s32 2, %v1874
    %v1876 = vrot.slane %v1865, %v1875
    %v1877 = vlaneseq
    %v1878 = vshrl.u32 %v1877, 7
    %v1879 = vsub.s32 4, %v1878
    %v1880 = vrot.slane %v1865, %v1879
    %v1881 = vlaneseq
    %v1882 = vshrl.u32 %v1881, 7
    %v1883 = vsub.s32 0, %v1882
    %v1884 = vrot.slane %v1866, %v1883
    %v1885 = vlaneseq
    %v1886 = vshrl.u32 %v1885, 7
    %v1887 = vsub.s32 2, %v1886
    %v1888 = vrot.slane %v1866, %v1887
    %v1889 = vlaneseq
    %v1890 = vshrl.u32 %v1889, 7
    %v1891 = vsub.s32 4, %v1890
    %v1892 = vrot.slane %v1866, %v1891
    %1893 = vrot.lane.b32.xlu0 %v1872, 94
    %v1894 = vpop.permute.xlu0 %1893
    %1895 = vrot.lane.b32.xlu0 %v1876, 94
    %v1896 = vpop.permute.xlu0 %1895
    %1897 = vrot.lane.b32.xlu0 %v1880, 94
    %v1898 = vpop.permute.xlu0 %1897
    %1899 = vrot.lane.b32.xlu0 %v1884, 94
    %v1900 = vpop.permute.xlu0 %1899
    %1901 = vrot.lane.b32.xlu0 %v1888, 94
    %v1902 = vpop.permute.xlu0 %1901
    %1903 = vrot.lane.b32.xlu0 %v1892, 94
    %v1904 = vpop.permute.xlu0 %1903
    %vm1905 = vcmask 769024
    %v1906 = vsel %vm1905, %v1894, %v1896
    %v1907 = vsel %vm1905, %v1896, %v1898
    %v1908 = vsel %vm1905, %v1900, %v1902
    %v1909 = vsel %vm1905, %v1902, %v1904
    %v1914 = vsel %vm1435, %v1906, 0.0
    %v1915 = vsel %vm1436, %v1907, 0.0
    %v1916 = vsel %vm1435, %v1908, 0.0
    %v1917 = vsel %vm1436, %v1909, 0.0
    %v1918 = vadd.f32 %v1845, %v1914
    %v1919 = vadd.f32 %v1846, %v1915
    %v1920 = vadd.f32 %v1847, %v1916
    %v1921 = vadd.f32 %v1848, %v1917
    %v1922 = vxor.u32 %v1918, 2147483648
    %v1923 = vxor.u32 %v1919, 2147483648
    %v1924 = vxor.u32 %v1920, 2147483648
    %v1925 = vxor.u32 %v1921, 2147483648
    %v1926 = vmul.f32 %v1922, 1.442695
    %v1927 = vpow.pop %v1926
    %v1928 = vmul.f32 %v1923, 1.442695
    %v1929 = vpow.pop %v1928
    %v1930 = vmul.f32 %v1924, 1.442695
    %v1931 = vpow.pop %v1930
    %v1932 = vmul.f32 %v1925, 1.442695
    %v1933 = vpow.pop %v1932
    %v1934 = vadd.f32 %v1927, 1.0
    %v1935 = vadd.f32 %v1929, 1.0
    %v1936 = vadd.f32 %v1931, 1.0
    %v1937 = vadd.f32 %v1933, 1.0
    %v1938 = vrcp.pop %v1934
    %v1939 = vmul.f32 1.0, %v1938
    %v1940 = vrcp.pop %v1935
    %v1941 = vmul.f32 1.0, %v1940
    %v1942 = vrcp.pop %v1936
    %v1943 = vmul.f32 1.0, %v1942
    %v1944 = vrcp.pop %v1937
    %v1945 = vmul.f32 1.0, %v1944
    %v1946 = vlaneseq
    %v1947 = vshrl.u32 %v1946, 7
    %v1948 = vsub.s32 0, %v1947
    %v1949 = vrot.slane %v1939, %v1948
    %v1950 = vlaneseq
    %v1951 = vshrl.u32 %v1950, 7
    %v1952 = vsub.s32 0, %v1951
    %v1953 = vrot.slane %v1941, %v1952
    %v1954 = vlaneseq
    %v1955 = vshrl.u32 %v1954, 7
    %v1956 = vsub.s32 0, %v1955
    %v1957 = vrot.slane %v1943, %v1956
    %v1958 = vlaneseq
    %v1959 = vshrl.u32 %v1958, 7
    %v1960 = vsub.s32 0, %v1959
    %v1961 = vrot.slane %v1945, %v1960
    %v1962 = vmul.f32 %v952, %v1949
    %v1963 = vmul.f32 %v952, %v1953
    %v1964 = vmul.f32 %v953, %v1957
    %v1965 = vmul.f32 %v953, %v1961
    %v1970 = vcombine.low %v1962, %v1963
    %v1971 = vcombine.high %v1962, %v1963
    %v1973 = vunpack.c.l.s4 1966171168
    %v1974 = vunpack.c.0.s8 %v1973
    %v1975 = vlaneseq
    %v1976 = vshrl.u32 %v1975, 7
    %v1977 = vsub.s32 %v1974, %v1976
    %v1978 = vrot.slane %v1970, %v1977
    %v1980 = vunpack.c.l.s4 1966171168
    %v1981 = vunpack.c.0.s8 %v1980
    %v1982 = vlaneseq
    %v1983 = vshrl.u32 %v1982, 7
    %v1984 = vsub.s32 %v1981, %v1983
    %v1985 = vrot.slane %v1971, %v1984
    %v1986 = vcombine.high %v1978, %v1978
    %v1987 = vcombine.high %v1985, %v1985
    %v1989 = vunpack.c.l.s4 1966171168
    %v1990 = vunpack.c.0.s8 %v1989
    %v1991 = vlaneseq
    %v1992 = vshrl.u32 %v1991, 7
    %v1993 = vsub.s32 %v1990, %v1992
    %v1994 = vrot.slane %v1978, %v1993
    %v1996 = vunpack.c.l.s4 1966171168
    %v1997 = vunpack.c.0.s8 %v1996
    %v1998 = vlaneseq
    %v1999 = vshrl.u32 %v1998, 7
    %v2000 = vsub.s32 %v1997, %v1999
    %v2001 = vrot.slane %v1985, %v2000
    %v2003 = vunpack.c.l.s4 1966171168
    %v2004 = vunpack.c.0.s8 %v2003
    %v2005 = vlaneseq
    %v2006 = vshrl.u32 %v2005, 7
    %v2007 = vsub.s32 %v2004, %v2006
    %v2008 = vrot.slane %v1986, %v2007
    %v2010 = vunpack.c.l.s4 1966171168
    %v2011 = vunpack.c.0.s8 %v2010
    %v2012 = vlaneseq
    %v2013 = vshrl.u32 %v2012, 7
    %v2014 = vsub.s32 %v2011, %v2013
    %v2015 = vrot.slane %v1987, %v2014
    %v2016 = vcombine.high %v1994, %v1994
    %v2017 = vcombine.high %v2001, %v2001
    %v2018 = vcombine.high %v2008, %v2008
    %v2019 = vcombine.high %v2015, %v2015
    %v2020 = vcombine.low %v1964, %v1965
    %v2021 = vcombine.high %v1964, %v1965
    %v2023 = vunpack.c.l.s4 1966171168
    %v2024 = vunpack.c.0.s8 %v2023
    %v2025 = vlaneseq
    %v2026 = vshrl.u32 %v2025, 7
    %v2027 = vsub.s32 %v2024, %v2026
    %v2028 = vrot.slane %v2020, %v2027
    %v2030 = vunpack.c.l.s4 1966171168
    %v2031 = vunpack.c.0.s8 %v2030
    %v2032 = vlaneseq
    %v2033 = vshrl.u32 %v2032, 7
    %v2034 = vsub.s32 %v2031, %v2033
    %v2035 = vrot.slane %v2021, %v2034
    %v2036 = vcombine.high %v2028, %v2028
    %v2037 = vcombine.high %v2035, %v2035
    %v2039 = vunpack.c.l.s4 1966171168
    %v2040 = vunpack.c.0.s8 %v2039
    %v2041 = vlaneseq
    %v2042 = vshrl.u32 %v2041, 7
    %v2043 = vsub.s32 %v2040, %v2042
    %v2044 = vrot.slane %v2028, %v2043
    %v2046 = vunpack.c.l.s4 1966171168
    %v2047 = vunpack.c.0.s8 %v2046
    %v2048 = vlaneseq
    %v2049 = vshrl.u32 %v2048, 7
    %v2050 = vsub.s32 %v2047, %v2049
    %v2051 = vrot.slane %v2035, %v2050
    %v2053 = vunpack.c.l.s4 1966171168
    %v2054 = vunpack.c.0.s8 %v2053
    %v2055 = vlaneseq
    %v2056 = vshrl.u32 %v2055, 7
    %v2057 = vsub.s32 %v2054, %v2056
    %v2058 = vrot.slane %v2036, %v2057
    %v2060 = vunpack.c.l.s4 1966171168
    %v2061 = vunpack.c.0.s8 %v2060
    %v2062 = vlaneseq
    %v2063 = vshrl.u32 %v2062, 7
    %v2064 = vsub.s32 %v2061, %v2063
    %v2065 = vrot.slane %v2037, %v2064
    %v2066 = vcombine.high %v2044, %v2044
    %v2067 = vcombine.high %v2051, %v2051
    %v2068 = vcombine.high %v2058, %v2058
    %v2069 = vcombine.high %v2065, %v2065
    %v2070 = vlaneseq
    %v2071 = vshrl.u32 %v2070, 7
    %v2072 = vsub.s32 0, %v2071
    %v2073 = vrot.slane %v1994, %v2072
    %v2074 = vlaneseq
    %v2075 = vshrl.u32 %v2074, 7
    %v2076 = vsub.s32 1, %v2075
    %v2077 = vrot.slane %v1994, %v2076
    %v2078 = vlaneseq
    %v2079 = vshrl.u32 %v2078, 7
    %v2080 = vsub.s32 0, %v2079
    %v2081 = vrot.slane %v2008, %v2080
    %v2082 = vlaneseq
    %v2083 = vshrl.u32 %v2082, 7
    %v2084 = vsub.s32 1, %v2083
    %v2085 = vrot.slane %v2008, %v2084
    %v2086 = vlaneseq
    %v2087 = vshrl.u32 %v2086, 7
    %v2088 = vsub.s32 0, %v2087
    %v2089 = vrot.slane %v2016, %v2088
    %v2090 = vlaneseq
    %v2091 = vshrl.u32 %v2090, 7
    %v2092 = vsub.s32 1, %v2091
    %v2093 = vrot.slane %v2016, %v2092
    %v2094 = vlaneseq
    %v2095 = vshrl.u32 %v2094, 7
    %v2096 = vsub.s32 0, %v2095
    %v2097 = vrot.slane %v2018, %v2096
    %v2098 = vlaneseq
    %v2099 = vshrl.u32 %v2098, 7
    %v2100 = vsub.s32 1, %v2099
    %v2101 = vrot.slane %v2018, %v2100
    %v2102 = vlaneseq
    %v2103 = vshrl.u32 %v2102, 7
    %v2104 = vsub.s32 0, %v2103
    %v2105 = vrot.slane %v2001, %v2104
    %v2106 = vlaneseq
    %v2107 = vshrl.u32 %v2106, 7
    %v2108 = vsub.s32 1, %v2107
    %v2109 = vrot.slane %v2001, %v2108
    %v2110 = vlaneseq
    %v2111 = vshrl.u32 %v2110, 7
    %v2112 = vsub.s32 0, %v2111
    %v2113 = vrot.slane %v2015, %v2112
    %v2114 = vlaneseq
    %v2115 = vshrl.u32 %v2114, 7
    %v2116 = vsub.s32 1, %v2115
    %v2117 = vrot.slane %v2015, %v2116
    %v2118 = vlaneseq
    %v2119 = vshrl.u32 %v2118, 7
    %v2120 = vsub.s32 0, %v2119
    %v2121 = vrot.slane %v2017, %v2120
    %v2122 = vlaneseq
    %v2123 = vshrl.u32 %v2122, 7
    %v2124 = vsub.s32 1, %v2123
    %v2125 = vrot.slane %v2017, %v2124
    %v2126 = vlaneseq
    %v2127 = vshrl.u32 %v2126, 7
    %v2128 = vsub.s32 0, %v2127
    %v2129 = vrot.slane %v2019, %v2128
    %v2130 = vlaneseq
    %v2131 = vshrl.u32 %v2130, 7
    %v2132 = vsub.s32 1, %v2131
    %v2133 = vrot.slane %v2019, %v2132
    %v2134 = vlaneseq
    %v2135 = vshrl.u32 %v2134, 7
    %v2136 = vsub.s32 0, %v2135
    %v2137 = vrot.slane %v2044, %v2136
    %v2138 = vlaneseq
    %v2139 = vshrl.u32 %v2138, 7
    %v2140 = vsub.s32 1, %v2139
    %v2141 = vrot.slane %v2044, %v2140
    %v2142 = vlaneseq
    %v2143 = vshrl.u32 %v2142, 7
    %v2144 = vsub.s32 0, %v2143
    %v2145 = vrot.slane %v2058, %v2144
    %v2146 = vlaneseq
    %v2147 = vshrl.u32 %v2146, 7
    %v2148 = vsub.s32 1, %v2147
    %v2149 = vrot.slane %v2058, %v2148
    %v2150 = vlaneseq
    %v2151 = vshrl.u32 %v2150, 7
    %v2152 = vsub.s32 0, %v2151
    %v2153 = vrot.slane %v2066, %v2152
    %v2154 = vlaneseq
    %v2155 = vshrl.u32 %v2154, 7
    %v2156 = vsub.s32 1, %v2155
    %v2157 = vrot.slane %v2066, %v2156
    %v2158 = vlaneseq
    %v2159 = vshrl.u32 %v2158, 7
    %v2160 = vsub.s32 0, %v2159
    %v2161 = vrot.slane %v2068, %v2160
    %v2162 = vlaneseq
    %v2163 = vshrl.u32 %v2162, 7
    %v2164 = vsub.s32 1, %v2163
    %v2165 = vrot.slane %v2068, %v2164
    %v2166 = vlaneseq
    %v2167 = vshrl.u32 %v2166, 7
    %v2168 = vsub.s32 0, %v2167
    %v2169 = vrot.slane %v2051, %v2168
    %v2170 = vlaneseq
    %v2171 = vshrl.u32 %v2170, 7
    %v2172 = vsub.s32 1, %v2171
    %v2173 = vrot.slane %v2051, %v2172
    %v2174 = vlaneseq
    %v2175 = vshrl.u32 %v2174, 7
    %v2176 = vsub.s32 0, %v2175
    %v2177 = vrot.slane %v2065, %v2176
    %v2178 = vlaneseq
    %v2179 = vshrl.u32 %v2178, 7
    %v2180 = vsub.s32 1, %v2179
    %v2181 = vrot.slane %v2065, %v2180
    %v2182 = vlaneseq
    %v2183 = vshrl.u32 %v2182, 7
    %v2184 = vsub.s32 0, %v2183
    %v2185 = vrot.slane %v2067, %v2184
    %v2186 = vlaneseq
    %v2187 = vshrl.u32 %v2186, 7
    %v2188 = vsub.s32 1, %v2187
    %v2189 = vrot.slane %v2067, %v2188
    %v2190 = vlaneseq
    %v2191 = vshrl.u32 %v2190, 7
    %v2192 = vsub.s32 0, %v2191
    %v2193 = vrot.slane %v2069, %v2192
    %v2194 = vlaneseq
    %v2195 = vshrl.u32 %v2194, 7
    %v2196 = vsub.s32 1, %v2195
    %v2197 = vrot.slane %v2069, %v2196
    %v2230 = vmul.f32 %v51, %v2073
    %v2231 = vmul.f32 %v52, %v2077
    %v2232 = vmul.f32 %v53, %v2081
    %v2233 = vmul.f32 %v54, %v2085
    %v2234 = vmul.f32 %v55, %v2089
    %v2235 = vmul.f32 %v56, %v2093
    %v2236 = vmul.f32 %v57, %v2097
    %v2237 = vmul.f32 %v58, %v2101
    %v2238 = vmul.f32 %v59, %v2105
    %v2239 = vmul.f32 %v60, %v2109
    %v2240 = vmul.f32 %v61, %v2113
    %v2241 = vmul.f32 %v62, %v2117
    %v2242 = vmul.f32 %v63, %v2121
    %v2243 = vmul.f32 %v64, %v2125
    %v2244 = vmul.f32 %v65, %v2129
    %v2245 = vmul.f32 %v66, %v2133
    %v2246 = vmul.f32 %v67, %v2137
    %v2247 = vmul.f32 %v68, %v2141
    %v2248 = vmul.f32 %v69, %v2145
    %v2249 = vmul.f32 %v70, %v2149
    %v2250 = vmul.f32 %v71, %v2153
    %v2251 = vmul.f32 %v72, %v2157
    %v2252 = vmul.f32 %v73, %v2161
    %v2253 = vmul.f32 %v74, %v2165
    %v2254 = vmul.f32 %v75, %v2169
    %v2255 = vmul.f32 %v76, %v2173
    %v2256 = vmul.f32 %v77, %v2177
    %v2257 = vmul.f32 %v78, %v2181
    %v2258 = vmul.f32 %v79, %v2185
    %v2259 = vmul.f32 %v80, %v2189
    %v2260 = vmul.f32 %v81, %v2193
    %v2261 = vmul.f32 %v82, %v2197
    %v2262 = vmax.f32 %v2230, 0.0
    %v2263 = vmax.f32 %v2231, 0.0
    %v2264 = vmax.f32 %v2232, 0.0
    %v2265 = vmax.f32 %v2233, 0.0
    %v2266 = vmax.f32 %v2234, 0.0
    %v2267 = vmax.f32 %v2235, 0.0
    %v2268 = vmax.f32 %v2236, 0.0
    %v2269 = vmax.f32 %v2237, 0.0
    %v2270 = vmax.f32 %v2238, 0.0
    %v2271 = vmax.f32 %v2239, 0.0
    %v2272 = vmax.f32 %v2240, 0.0
    %v2273 = vmax.f32 %v2241, 0.0
    %v2274 = vmax.f32 %v2242, 0.0
    %v2275 = vmax.f32 %v2243, 0.0
    %v2276 = vmax.f32 %v2244, 0.0
    %v2277 = vmax.f32 %v2245, 0.0
    %v2278 = vmax.f32 %v2246, 0.0
    %v2279 = vmax.f32 %v2247, 0.0
    %v2280 = vmax.f32 %v2248, 0.0
    %v2281 = vmax.f32 %v2249, 0.0
    %v2282 = vmax.f32 %v2250, 0.0
    %v2283 = vmax.f32 %v2251, 0.0
    %v2284 = vmax.f32 %v2252, 0.0
    %v2285 = vmax.f32 %v2253, 0.0
    %v2286 = vmax.f32 %v2254, 0.0
    %v2287 = vmax.f32 %v2255, 0.0
    %v2288 = vmax.f32 %v2256, 0.0
    %v2289 = vmax.f32 %v2257, 0.0
    %v2290 = vmax.f32 %v2258, 0.0
    %v2291 = vmax.f32 %v2259, 0.0
    %v2292 = vmax.f32 %v2260, 0.0
    %v2293 = vmax.f32 %v2261, 0.0
    %2294 = vst [vmem:[#allocation8] sm:$0xff] %v2262
    %2295 = vst [vmem:[#allocation8 + $0x8] sm:$0xff] %v2263
    %2296 = vst [vmem:[#allocation8 + $0x10] sm:$0xff] %v2264
    %2297 = vst [vmem:[#allocation8 + $0x18] sm:$0xff] %v2265
    %2298 = vst [vmem:[#allocation8 + $0x20] sm:$0xff] %v2266
    %2299 = vst [vmem:[#allocation8 + $0x28] sm:$0xff] %v2267
    %2300 = vst [vmem:[#allocation8 + $0x30] sm:$0xff] %v2268
    %2301 = vst [vmem:[#allocation8 + $0x38] sm:$0xff] %v2269
    %2302 = vst [vmem:[#allocation8 + $0x40] sm:$0xff] %v2270
    %2303 = vst [vmem:[#allocation8 + $0x48] sm:$0xff] %v2271
    %2304 = vst [vmem:[#allocation8 + $0x50] sm:$0xff] %v2272
    %2305 = vst [vmem:[#allocation8 + $0x58] sm:$0xff] %v2273
    %2306 = vst [vmem:[#allocation8 + $0x60] sm:$0xff] %v2274
    %2307 = vst [vmem:[#allocation8 + $0x68] sm:$0xff] %v2275
    %2308 = vst [vmem:[#allocation8 + $0x70] sm:$0xff] %v2276
    %2309 = vst [vmem:[#allocation8 + $0x78] sm:$0xff] %v2277
    %2310 = vst [vmem:[#allocation8 + $0x80] sm:$0xff] %v2278
    %2311 = vst [vmem:[#allocation8 + $0x88] sm:$0xff] %v2279
    %2312 = vst [vmem:[#allocation8 + $0x90] sm:$0xff] %v2280
    %2313 = vst [vmem:[#allocation8 + $0x98] sm:$0xff] %v2281
    %2314 = vst [vmem:[#allocation8 + $0xa0] sm:$0xff] %v2282
    %2315 = vst [vmem:[#allocation8 + $0xa8] sm:$0xff] %v2283
    %2316 = vst [vmem:[#allocation8 + $0xb0] sm:$0xff] %v2284
    %2317 = vst [vmem:[#allocation8 + $0xb8] sm:$0xff] %v2285
    %2318 = vst [vmem:[#allocation8 + $0xc0] sm:$0xff] %v2286
    %2319 = vst [vmem:[#allocation8 + $0xc8] sm:$0xff] %v2287
    %2320 = vst [vmem:[#allocation8 + $0xd0] sm:$0xff] %v2288
    %2321 = vst [vmem:[#allocation8 + $0xd8] sm:$0xff] %v2289
    %2322 = vst [vmem:[#allocation8 + $0xe0] sm:$0xff] %v2290
    %2323 = vst [vmem:[#allocation8 + $0xe8] sm:$0xff] %v2291
    %2324 = vst [vmem:[#allocation8 + $0xf0] sm:$0xff] %v2292
    %2325 = vst [vmem:[#allocation8 + $0xf8] sm:$0xff] %v2293
    // Predicated region
    $region34: #{tpu_custom_call.1} parent=1 // pred_check
      _
    $region35: #{tpu_custom_call.1} parent=1 // pred_check_branch
      %2327 = sbr.rel (0) target = $region37
    $region36: #{tpu_custom_call.1} parent=1 // pred_region
      %s2329 = ssub.s32 4096, 4096
      %2330 = vsyncadd [#allocation5], %s2329
      %s2331 = sshll.u32 [#allocation8], 4
      %s2332 = int_to_ptr.vmem [resolvable:$true] %s2331
      %2337 = dma.vmem_to_hbm [thread:$0]  %s2332, 4096, %s6, [#allocation5], 256, 256, 16
    $region37: #{tpu_custom_call.1} parent=1 // pred_fallthru
      _
    // Predicated region
    $region38: #{tpu_custom_call.1} parent=1 // pred_check
      _
    $region39: #{tpu_custom_call.1} parent=1 // pred_check_branch
      %2339 = sbr.rel (0) target = $region41
    $region40: #{tpu_custom_call.1} parent=1 // pred_region
      %2340 = dma.done [#allocation5], 4096
    $region41: #{tpu_custom_call.1} parent=1 // pred_fallthru
      _
    %2341 = vsyncpa [#allocation4], 1
    %2342 = vsyncpa [#allocation5], 1
    %2343 = vsyncpa [#allocation6], 1

</llo_original>
